<compile_context>
chip_gen: v5e
topology: v5e:2x2
jax: 0.10.0
libtpu: 0.0.40
codegen_flags: <defaults>
</compile_context>

<pallas_src>
import functools

import jax
import jax.numpy as jnp
from jax import lax
from jax.experimental import pallas as pl
from jax.experimental.pallas import tpu as pltpu


# ------------------------------ fused kernel --------------------------------

def _fused_attention_kernel(x_ref, wp_ref, wk_ref, wv_ref, wo_ref,
                            gamma_ref, beta_ref, out_ref, opad_ref,
                            *, heads, patch, seq, batch, eps):
    # Lane layout everywhere: lane = c * (S*B) + s * B + b.
    # x_ref:     (P+2, P+2, S*B)    zero-padded input (replicated in-kernel)
    # wp_ref:    (9, 3H*S*B)        conv_project tap weights as lane vectors
    # wk_ref:    (3, H*S*B)         reduce_k taps (1/P softmax scale folded in)
    # wv_ref:    (3, H*S*B)         reduce_v taps
    # wo_ref:    (9, H*S*B)         conv_out tap weights as lane vectors
    # gamma_ref: (P, P, S*B)        LayerNorm affine, pre-broadcast over lanes
    # beta_ref:  (P, P, S*B)
    # out_ref:   (P, P, S*B)        kernel-native output (wrapper relayouts)
    # opad_ref:  (H, P+2, P+2, S*B) VMEM scratch: padded per-head attn output
    H, P, S, B = heads, patch, seq, batch
    SB = S * B
    C = 3 * H
    Sr = (S + 2 - 3) // 4 + 1          # Conv2d k=3, stride=4, pad=1 output len

    # ---- conv_project: 9 full-width lane-stacked taps -----------------------
    xp = x_ref[...]                                      # (P+2, P+2, SB)
    xrep = jnp.concatenate([xp] * C, axis=-1)            # (P+2, P+2, C*SB)
    ysh = [xrep[:, dy:dy + P, :] for dy in range(3)]     # 3 dy-shifted copies

    proj = None
    for t in range(9):
        dx, dy = divmod(t, 3)
        w = wp_ref[t].reshape(1, 1, -1)                  # (1, 1, C*SB)
        term = w * ysh[dy][dx:dx + P]                    # (P, P, C*SB)
        proj = term if proj is None else proj + term
    # proj lanes: q -> channels [0, H), k -> [H, 2H), v -> [2H, 3H)

    # ---- attention core: vectorized over the (s, b) lanes --------------------
    k_chunk = proj[:, :, H * SB:2 * H * SB]              # (P, P, H*SB)
    v_chunk = proj[:, :, 2 * H * SB:3 * H * SB]
    pk = [wk_ref[u].reshape(1, 1, -1) * k_chunk for u in range(3)]
    pv = [wv_ref[u].reshape(1, 1, -1) * v_chunk for u in range(3)]

    o_heads = []
    for h in range(H):
        q = proj[:, :, h * SB:(h + 1) * SB]              # (P, P, SB)
        d_rows, vr_list = [], []
        for j in range(Sr):
            kr, vr = None, None
            for u in range(3):
                s0 = 4 * j + u - 1                       # stride-4 / pad-1 tap
                if 0 <= s0 < S:
                    lo = h * SB + s0 * B
                    ksl = pk[u][:, :, lo:lo + B]         # (P, P, B)
                    vsl = pv[u][:, :, lo:lo + B]
                    kr = ksl if kr is None else kr + ksl
                    vr = vsl if vr is None else vr + vsl
            if kr is None:                               # cannot happen here
                kr = jnp.zeros((P, P, B), jnp.float32)
                vr = jnp.zeros((P, P, B), jnp.float32)
            kr_t = jnp.concatenate([kr] * S, axis=-1)    # broadcast over s lanes
            d_rows.append(jnp.sum(q * kr_t, axis=(0, 1), keepdims=True))
            vr_list.append(vr)

        # softmax over the Sr landmarks, all (s, b) lanes at once (exact math)
        dots = jnp.concatenate(d_rows, axis=0)           # (Sr, 1, SB)
        m = jnp.max(dots, axis=0, keepdims=True)
        e = jnp.exp(dots - m)
        den = jnp.sum(e, axis=0, keepdims=True)
        attn = e / den                                   # exact reciprocal

        o_h = None
        for j in range(Sr):
            vr_t = jnp.concatenate([vr_list[j]] * S, axis=-1)   # (P, P, SB)
            term = attn[j:j + 1] * vr_t
            o_h = term if o_h is None else o_h + term
        o_heads.append(o_h)                              # (P, P, SB)

    # ---- conv_out (lane-stacked over heads) + LayerNorm((P, P)) -------------
    opad_ref[...] = jnp.zeros(opad_ref.shape, jnp.float32)
    for h in range(H):
        opad_ref[h, 1:P + 1, 1:P + 1, :] = o_heads[h]
    opc = jnp.concatenate([opad_ref[h] for h in range(H)], axis=-1)
    osh = [opc[:, dy:dy + P, :] for dy in range(3)]      # 3 dy-shifted copies

    acc = None
    for t in range(9):
        dx, dy = divmod(t, 3)
        w = wo_ref[t].reshape(1, 1, -1)                  # (1, 1, H*SB)
        term = w * osh[dy][dx:dx + P]                    # (P, P, H*SB)
        acc = term if acc is None else acc + term
    co = acc[:, :, 0:SB]
    for h in range(1, H):
        co = co + acc[:, :, h * SB:(h + 1) * SB]         # sum over heads

    mu = jnp.mean(co, axis=(0, 1), keepdims=True)        # LN over (x,y) per (s,b)
    var = jnp.mean((co - mu) ** 2, axis=(0, 1), keepdims=True)
    yn = (co - mu) / jnp.sqrt(var + eps)
    out_ref[...] = yn * gamma_ref[...] + beta_ref[...]


# -------------------------------- wrapper ------------------------------------

def attention_forward(x, params, heads, patch):
    B = x.shape[0]
    S = x.shape[-1]
    H, P = heads, patch
    SB = S * B

    # lane-dense input slab: (P+2, P+2, S*B), lane = s*B + b
    xt = jnp.transpose(x[:, 0], (1, 2, 3, 0)).reshape(P, P, SB)
    xpad = jnp.pad(xt, ((1, 1), (1, 1), (0, 0)))

    # tap weights as full-width lane vectors (trace-time repack, tiny)
    wp = params["w_proj"][:, 0, :, :, 0].reshape(3 * H, 9)
    wp_lanes = jnp.repeat(wp, SB, axis=0).T                       # (9, 3H*SB)
    wk = params["w_redk"][:, 0, :, 0] * (1.0 / P)                 # fold 1/P scale
    wv = params["w_redv"][:, 0, :, 0]
    wk_lanes = jnp.repeat(wk, SB, axis=0).T                       # (3, H*SB)
    wv_lanes = jnp.repeat(wv, SB, axis=0).T
    wo = params["w_out"][0, :, :, :, 0].reshape(H, 9)
    wo_lanes = jnp.repeat(wo, SB, axis=0).T                       # (9, H*SB)
    gamma = jnp.broadcast_to(params["ln_gamma"].reshape(P, P, 1), (P, P, SB))
    beta = jnp.broadcast_to(params["ln_beta"].reshape(P, P, 1), (P, P, SB))

    vmem = pl.BlockSpec(memory_space=pltpu.MemorySpace.VMEM)

    y = pl.pallas_call(
        functools.partial(_fused_attention_kernel, heads=H, patch=P,
                          seq=S, batch=B, eps=1e-5),
        out_shape=jax.ShapeDtypeStruct((P, P, SB), jnp.float32),
        in_specs=[vmem] * 7,
        out_specs=vmem,
        scratch_shapes=[pltpu.VMEM((H, P + 2, P + 2, SB), jnp.float32)],
    )(xpad, wp_lanes, wk_lanes, wv_lanes, wo_lanes, gamma, beta)

    # kernel-native (P, P, s*B + b)  ->  module-native (B, 1, P, P, S)
    y = jnp.transpose(y.reshape(P, P, S, B), (3, 0, 1, 2))
    return y[:, None]


# ----------------------- pure-JAX reference (for checking) ------------------

def reference_forward(x, params, heads, patch):
    H, P = heads, patch
    B = x.shape[0]
    S = x.shape[-1]
    D = P * P
    hp = lax.Precision.HIGHEST
    Wp, Wk, Wv, Wo = (params["w_proj"], params["w_redk"],
                      params["w_redv"], params["w_out"])
    gamma, beta = params["ln_gamma"], params["ln_beta"]

    proj = lax.conv_general_dilated(
        x, Wp, window_strides=(1, 1, 1), padding=((1, 1), (1, 1), (0, 0)),
        dimension_numbers=("NCDHW", "OIDHW", "NCDHW"), precision=hp)
    r = jnp.transpose(proj, (0, 4, 1, 2, 3)).reshape(B, S, 3 * H * D)
    qc, kc, vc = jnp.split(r, 3, axis=-1)

    def to_bhsd(a):
        return jnp.transpose(a.reshape(B, S, H, D), (0, 2, 1, 3))

    q, k, v = to_bhsd(qc), to_bhsd(kc), to_bhsd(vc)

    def reduce(t, w):
        return lax.conv_general_dilated(
            t, w, window_strides=(4, 1), padding=((1, 1), (0, 0)),
            dimension_numbers=("NCHW", "OIHW", "NCHW"),
            feature_group_count=H, precision=hp)

    kr = reduce(k, Wk)
    vr = reduce(v, Wv)
    dots = jnp.einsum("bhid,bhjd->bhij", q, kr, precision=hp) * (1.0 / P)
    attn = jax.nn.softmax(dots, axis=-1)
    out = jnp.einsum("bhij,bhjd->bhid", attn, vr, precision=hp)
    o5 = jnp.transpose(out.reshape(B, H, S, P, P), (0, 1, 3, 4, 2))
    co = lax.conv_general_dilated(
        o5, Wo, window_strides=(1, 1, 1), padding=((1, 1), (1, 1), (0, 0)),
        dimension_numbers=("NCDHW", "OIDHW", "NCDHW"), precision=hp)
    t = jnp.transpose(co, (0, 1, 4, 2, 3))
    mean = jnp.mean(t, axis=(-2, -1), keepdims=True)
    var = jnp.mean((t - mean) ** 2, axis=(-2, -1), keepdims=True)
    tn = (t - mean) / jnp.sqrt(var + 1e-5) * gamma + beta
    return jnp.transpose(tn, (0, 1, 3, 4, 2))


# --------------------------------- main --------------------------------------

if __name__ == "__main__":
    heads, patch, S, B = 2, 4, 8, 2
    H, P = heads, patch

    key = jax.random.PRNGKey(0)
    k1, k2, k3, k4, k5, k6, kx = jax.random.split(key, 7)
    params = dict(
        w_proj=jax.random.normal(k1, (3 * H, 1, 3, 3, 1), jnp.float32) / 3.0,
        w_redk=jax.random.normal(k2, (H, 1, 3, 1), jnp.float32) * 0.5,
        w_redv=jax.random.normal(k3, (H, 1, 3, 1), jnp.float32) * 0.5,
        w_out=jax.random.normal(k4, (1, H, 3, 3, 1), jnp.float32) / (9 * H) ** 0.5,
        ln_gamma=1.0 + 0.1 * jax.random.normal(k5, (P, P), jnp.float32),
        ln_beta=0.1 * jax.random.normal(k6, (P, P), jnp.float32),
    )
    x = jax.random.normal(kx, (B, 1, P, P, S), jnp.float32)

    fwd = jax.jit(functools.partial(attention_forward, heads=heads, patch=patch))
    out = jax.block_until_ready(fwd(x, params))
    assert out.shape == (B, 1, P, P, S), out.shape

    ref = reference_forward(x, params, heads, patch)
    err = float(jnp.max(jnp.abs(out - ref)))
    if not bool(jnp.allclose(out, ref, atol=2e-3, rtol=2e-3)):
        raise SystemExit(f"mismatch vs reference, max abs err = {err:e}")
    print("KERNEL_OK")
</pallas_src>

<mosaic_0001>
module attributes {stable_mosaic.version = 11 : i64} {
  func.func @_fused_attention_kernel(%arg0: memref<6x6x16xf32, #tpu.memory_space<vmem>>, %arg1: memref<9x96xf32, #tpu.memory_space<vmem>>, %arg2: memref<3x32xf32, #tpu.memory_space<vmem>>, %arg3: memref<3x32xf32, #tpu.memory_space<vmem>>, %arg4: memref<9x32xf32, #tpu.memory_space<vmem>>, %arg5: memref<4x4x16xf32, #tpu.memory_space<vmem>>, %arg6: memref<4x4x16xf32, #tpu.memory_space<vmem>>, %arg7: memref<4x4x16xf32, #tpu.memory_space<vmem>>, %arg8: memref<2x6x6x16xf32, #tpu.memory_space<vmem>>) attributes {dimension_semantics = [], scalar_prefetch = 0 : i64, scratch_operands = 1 : i64, tpu.core_type = #tpu.core_type<tc>} {
    %c0 = arith.constant 0 : index
    %c0_0 = arith.constant 0 : index
    %c0_1 = arith.constant 0 : index
    %0 = vector.load %arg0[%c0, %c0_0, %c0_1] : memref<6x6x16xf32, #tpu.memory_space<vmem>>, vector<6x6x16xf32>
    %1 = tpu.concatenate %0, %0, %0, %0, %0, %0 in 2 : vector<6x6x16xf32>, vector<6x6x16xf32>, vector<6x6x16xf32>, vector<6x6x16xf32>, vector<6x6x16xf32>, vector<6x6x16xf32> -> vector<6x6x96xf32>
    %2 = vector.extract_strided_slice %1 {offsets = [0, 0, 0], sizes = [6, 4, 96], strides = [1, 1, 1]} : vector<6x6x96xf32> to vector<6x4x96xf32>
    %3 = vector.extract_strided_slice %1 {offsets = [0, 1, 0], sizes = [6, 4, 96], strides = [1, 1, 1]} : vector<6x6x96xf32> to vector<6x4x96xf32>
    %4 = vector.extract_strided_slice %1 {offsets = [0, 2, 0], sizes = [6, 4, 96], strides = [1, 1, 1]} : vector<6x6x96xf32> to vector<6x4x96xf32>
    %c0_2 = arith.constant 0 : index
    %c0_3 = arith.constant 0 : index
    %5 = vector.load %arg1[%c0_2, %c0_3] : memref<9x96xf32, #tpu.memory_space<vmem>>, vector<1x96xf32>
    %6 = vector.shape_cast %5 : vector<1x96xf32> to vector<96xf32>
    %7 = vector.shape_cast %6 : vector<96xf32> to vector<1x1x96xf32>
    %8 = vector.extract_strided_slice %2 {offsets = [0, 0, 0], sizes = [4, 4, 96], strides = [1, 1, 1]} : vector<6x4x96xf32> to vector<4x4x96xf32>
    %9 = vector.broadcast %7 : vector<1x1x96xf32> to vector<4x4x96xf32>
    %10 = arith.mulf %9, %8 : vector<4x4x96xf32>
    %c1 = arith.constant 1 : index
    %c0_4 = arith.constant 0 : index
    %11 = vector.load %arg1[%c1, %c0_4] : memref<9x96xf32, #tpu.memory_space<vmem>>, vector<1x96xf32>
    %12 = vector.shape_cast %11 : vector<1x96xf32> to vector<96xf32>
    %13 = vector.shape_cast %12 : vector<96xf32> to vector<1x1x96xf32>
    %14 = vector.extract_strided_slice %3 {offsets = [0, 0, 0], sizes = [4, 4, 96], strides = [1, 1, 1]} : vector<6x4x96xf32> to vector<4x4x96xf32>
    %15 = vector.broadcast %13 : vector<1x1x96xf32> to vector<4x4x96xf32>
    %16 = arith.mulf %15, %14 : vector<4x4x96xf32>
    %17 = arith.addf %10, %16 : vector<4x4x96xf32>
    %c2 = arith.constant 2 : index
    %c0_5 = arith.constant 0 : index
    %18 = vector.load %arg1[%c2, %c0_5] : memref<9x96xf32, #tpu.memory_space<vmem>>, vector<1x96xf32>
    %19 = vector.shape_cast %18 : vector<1x96xf32> to vector<96xf32>
    %20 = vector.shape_cast %19 : vector<96xf32> to vector<1x1x96xf32>
    %21 = vector.extract_strided_slice %4 {offsets = [0, 0, 0], sizes = [4, 4, 96], strides = [1, 1, 1]} : vector<6x4x96xf32> to vector<4x4x96xf32>
    %22 = vector.broadcast %20 : vector<1x1x96xf32> to vector<4x4x96xf32>
    %23 = arith.mulf %22, %21 : vector<4x4x96xf32>
    %24 = arith.addf %17, %23 : vector<4x4x96xf32>
    %c3 = arith.constant 3 : index
    %c0_6 = arith.constant 0 : index
    %25 = vector.load %arg1[%c3, %c0_6] : memref<9x96xf32, #tpu.memory_space<vmem>>, vector<1x96xf32>
    %26 = vector.shape_cast %25 : vector<1x96xf32> to vector<96xf32>
    %27 = vector.shape_cast %26 : vector<96xf32> to vector<1x1x96xf32>
    %28 = vector.extract_strided_slice %2 {offsets = [1, 0, 0], sizes = [4, 4, 96], strides = [1, 1, 1]} : vector<6x4x96xf32> to vector<4x4x96xf32>
    %29 = vector.broadcast %27 : vector<1x1x96xf32> to vector<4x4x96xf32>
    %30 = arith.mulf %29, %28 : vector<4x4x96xf32>
    %31 = arith.addf %24, %30 : vector<4x4x96xf32>
    %c4 = arith.constant 4 : index
    %c0_7 = arith.constant 0 : index
    %32 = vector.load %arg1[%c4, %c0_7] : memref<9x96xf32, #tpu.memory_space<vmem>>, vector<1x96xf32>
    %33 = vector.shape_cast %32 : vector<1x96xf32> to vector<96xf32>
    %34 = vector.shape_cast %33 : vector<96xf32> to vector<1x1x96xf32>
    %35 = vector.extract_strided_slice %3 {offsets = [1, 0, 0], sizes = [4, 4, 96], strides = [1, 1, 1]} : vector<6x4x96xf32> to vector<4x4x96xf32>
    %36 = vector.broadcast %34 : vector<1x1x96xf32> to vector<4x4x96xf32>
    %37 = arith.mulf %36, %35 : vector<4x4x96xf32>
    %38 = arith.addf %31, %37 : vector<4x4x96xf32>
    %c5 = arith.constant 5 : index
    %c0_8 = arith.constant 0 : index
    %39 = vector.load %arg1[%c5, %c0_8] : memref<9x96xf32, #tpu.memory_space<vmem>>, vector<1x96xf32>
    %40 = vector.shape_cast %39 : vector<1x96xf32> to vector<96xf32>
    %41 = vector.shape_cast %40 : vector<96xf32> to vector<1x1x96xf32>
    %42 = vector.extract_strided_slice %4 {offsets = [1, 0, 0], sizes = [4, 4, 96], strides = [1, 1, 1]} : vector<6x4x96xf32> to vector<4x4x96xf32>
    %43 = vector.broadcast %41 : vector<1x1x96xf32> to vector<4x4x96xf32>
    %44 = arith.mulf %43, %42 : vector<4x4x96xf32>
    %45 = arith.addf %38, %44 : vector<4x4x96xf32>
    %c6 = arith.constant 6 : index
    %c0_9 = arith.constant 0 : index
    %46 = vector.load %arg1[%c6, %c0_9] : memref<9x96xf32, #tpu.memory_space<vmem>>, vector<1x96xf32>
    %47 = vector.shape_cast %46 : vector<1x96xf32> to vector<96xf32>
    %48 = vector.shape_cast %47 : vector<96xf32> to vector<1x1x96xf32>
    %49 = vector.extract_strided_slice %2 {offsets = [2, 0, 0], sizes = [4, 4, 96], strides = [1, 1, 1]} : vector<6x4x96xf32> to vector<4x4x96xf32>
    %50 = vector.broadcast %48 : vector<1x1x96xf32> to vector<4x4x96xf32>
    %51 = arith.mulf %50, %49 : vector<4x4x96xf32>
    %52 = arith.addf %45, %51 : vector<4x4x96xf32>
    %c7 = arith.constant 7 : index
    %c0_10 = arith.constant 0 : index
    %53 = vector.load %arg1[%c7, %c0_10] : memref<9x96xf32, #tpu.memory_space<vmem>>, vector<1x96xf32>
    %54 = vector.shape_cast %53 : vector<1x96xf32> to vector<96xf32>
    %55 = vector.shape_cast %54 : vector<96xf32> to vector<1x1x96xf32>
    %56 = vector.extract_strided_slice %3 {offsets = [2, 0, 0], sizes = [4, 4, 96], strides = [1, 1, 1]} : vector<6x4x96xf32> to vector<4x4x96xf32>
    %57 = vector.broadcast %55 : vector<1x1x96xf32> to vector<4x4x96xf32>
    %58 = arith.mulf %57, %56 : vector<4x4x96xf32>
    %59 = arith.addf %52, %58 : vector<4x4x96xf32>
    %c8 = arith.constant 8 : index
    %c0_11 = arith.constant 0 : index
    %60 = vector.load %arg1[%c8, %c0_11] : memref<9x96xf32, #tpu.memory_space<vmem>>, vector<1x96xf32>
    %61 = vector.shape_cast %60 : vector<1x96xf32> to vector<96xf32>
    %62 = vector.shape_cast %61 : vector<96xf32> to vector<1x1x96xf32>
    %63 = vector.extract_strided_slice %4 {offsets = [2, 0, 0], sizes = [4, 4, 96], strides = [1, 1, 1]} : vector<6x4x96xf32> to vector<4x4x96xf32>
    %64 = vector.broadcast %62 : vector<1x1x96xf32> to vector<4x4x96xf32>
    %65 = arith.mulf %64, %63 : vector<4x4x96xf32>
    %66 = arith.addf %59, %65 : vector<4x4x96xf32>
    %67 = vector.extract_strided_slice %66 {offsets = [0, 0, 32], sizes = [4, 4, 32], strides = [1, 1, 1]} : vector<4x4x96xf32> to vector<4x4x32xf32>
    %68 = vector.extract_strided_slice %66 {offsets = [0, 0, 64], sizes = [4, 4, 32], strides = [1, 1, 1]} : vector<4x4x96xf32> to vector<4x4x32xf32>
    %c0_12 = arith.constant 0 : index
    %c0_13 = arith.constant 0 : index
    %69 = vector.load %arg2[%c0_12, %c0_13] : memref<3x32xf32, #tpu.memory_space<vmem>>, vector<1x32xf32>
    %70 = vector.shape_cast %69 : vector<1x32xf32> to vector<32xf32>
    %71 = vector.shape_cast %70 : vector<32xf32> to vector<1x1x32xf32>
    %72 = vector.broadcast %71 : vector<1x1x32xf32> to vector<4x4x32xf32>
    %73 = arith.mulf %72, %67 : vector<4x4x32xf32>
    %c1_14 = arith.constant 1 : index
    %c0_15 = arith.constant 0 : index
    %74 = vector.load %arg2[%c1_14, %c0_15] : memref<3x32xf32, #tpu.memory_space<vmem>>, vector<1x32xf32>
    %75 = vector.shape_cast %74 : vector<1x32xf32> to vector<32xf32>
    %76 = vector.shape_cast %75 : vector<32xf32> to vector<1x1x32xf32>
    %77 = vector.broadcast %76 : vector<1x1x32xf32> to vector<4x4x32xf32>
    %78 = arith.mulf %77, %67 : vector<4x4x32xf32>
    %c2_16 = arith.constant 2 : index
    %c0_17 = arith.constant 0 : index
    %79 = vector.load %arg2[%c2_16, %c0_17] : memref<3x32xf32, #tpu.memory_space<vmem>>, vector<1x32xf32>
    %80 = vector.shape_cast %79 : vector<1x32xf32> to vector<32xf32>
    %81 = vector.shape_cast %80 : vector<32xf32> to vector<1x1x32xf32>
    %82 = vector.broadcast %81 : vector<1x1x32xf32> to vector<4x4x32xf32>
    %83 = arith.mulf %82, %67 : vector<4x4x32xf32>
    %c0_18 = arith.constant 0 : index
    %c0_19 = arith.constant 0 : index
    %84 = vector.load %arg3[%c0_18, %c0_19] : memref<3x32xf32, #tpu.memory_space<vmem>>, vector<1x32xf32>
    %85 = vector.shape_cast %84 : vector<1x32xf32> to vector<32xf32>
    %86 = vector.shape_cast %85 : vector<32xf32> to vector<1x1x32xf32>
    %87 = vector.broadcast %86 : vector<1x1x32xf32> to vector<4x4x32xf32>
    %88 = arith.mulf %87, %68 : vector<4x4x32xf32>
    %c1_20 = arith.constant 1 : index
    %c0_21 = arith.constant 0 : index
    %89 = vector.load %arg3[%c1_20, %c0_21] : memref<3x32xf32, #tpu.memory_space<vmem>>, vector<1x32xf32>
    %90 = vector.shape_cast %89 : vector<1x32xf32> to vector<32xf32>
    %91 = vector.shape_cast %90 : vector<32xf32> to vector<1x1x32xf32>
    %92 = vector.broadcast %91 : vector<1x1x32xf32> to vector<4x4x32xf32>
    %93 = arith.mulf %92, %68 : vector<4x4x32xf32>
    %c2_22 = arith.constant 2 : index
    %c0_23 = arith.constant 0 : index
    %94 = vector.load %arg3[%c2_22, %c0_23] : memref<3x32xf32, #tpu.memory_space<vmem>>, vector<1x32xf32>
    %95 = vector.shape_cast %94 : vector<1x32xf32> to vector<32xf32>
    %96 = vector.shape_cast %95 : vector<32xf32> to vector<1x1x32xf32>
    %97 = vector.broadcast %96 : vector<1x1x32xf32> to vector<4x4x32xf32>
    %98 = arith.mulf %97, %68 : vector<4x4x32xf32>
    %99 = vector.extract_strided_slice %66 {offsets = [0, 0, 0], sizes = [4, 4, 16], strides = [1, 1, 1]} : vector<4x4x96xf32> to vector<4x4x16xf32>
    %100 = vector.extract_strided_slice %78 {offsets = [0, 0, 0], sizes = [4, 4, 2], strides = [1, 1, 1]} : vector<4x4x32xf32> to vector<4x4x2xf32>
    %101 = vector.extract_strided_slice %93 {offsets = [0, 0, 0], sizes = [4, 4, 2], strides = [1, 1, 1]} : vector<4x4x32xf32> to vector<4x4x2xf32>
    %102 = vector.extract_strided_slice %83 {offsets = [0, 0, 2], sizes = [4, 4, 2], strides = [1, 1, 1]} : vector<4x4x32xf32> to vector<4x4x2xf32>
    %103 = vector.extract_strided_slice %98 {offsets = [0, 0, 2], sizes = [4, 4, 2], strides = [1, 1, 1]} : vector<4x4x32xf32> to vector<4x4x2xf32>
    %104 = arith.addf %100, %102 : vector<4x4x2xf32>
    %105 = arith.addf %101, %103 : vector<4x4x2xf32>
    %106 = tpu.concatenate %104, %104, %104, %104, %104, %104, %104, %104 in 2 : vector<4x4x2xf32>, vector<4x4x2xf32>, vector<4x4x2xf32>, vector<4x4x2xf32>, vector<4x4x2xf32>, vector<4x4x2xf32>, vector<4x4x2xf32>, vector<4x4x2xf32> -> vector<4x4x16xf32>
    %107 = arith.mulf %99, %106 : vector<4x4x16xf32>
    %cst = arith.constant dense<0.000000e+00> : vector<16xf32>
    %108 = vector.multi_reduction <add>, %107, %cst [0, 1] : vector<4x4x16xf32> to vector<16xf32>
    %109 = vector.shape_cast %108 : vector<16xf32> to vector<1x1x16xf32>
    %110 = vector.extract_strided_slice %73 {offsets = [0, 0, 6], sizes = [4, 4, 2], strides = [1, 1, 1]} : vector<4x4x32xf32> to vector<4x4x2xf32>
    %111 = vector.extract_strided_slice %88 {offsets = [0, 0, 6], sizes = [4, 4, 2], strides = [1, 1, 1]} : vector<4x4x32xf32> to vector<4x4x2xf32>
    %112 = vector.extract_strided_slice %78 {offsets = [0, 0, 8], sizes = [4, 4, 2], strides = [1, 1, 1]} : vector<4x4x32xf32> to vector<4x4x2xf32>
    %113 = vector.extract_strided_slice %93 {offsets = [0, 0, 8], sizes = [4, 4, 2], strides = [1, 1, 1]} : vector<4x4x32xf32> to vector<4x4x2xf32>
    %114 = arith.addf %110, %112 : vector<4x4x2xf32>
    %115 = arith.addf %111, %113 : vector<4x4x2xf32>
    %116 = vector.extract_strided_slice %83 {offsets = [0, 0, 10], sizes = [4, 4, 2], strides = [1, 1, 1]} : vector<4x4x32xf32> to vector<4x4x2xf32>
    %117 = vector.extract_strided_slice %98 {offsets = [0, 0, 10], sizes = [4, 4, 2], strides = [1, 1, 1]} : vector<4x4x32xf32> to vector<4x4x2xf32>
    %118 = arith.addf %114, %116 : vector<4x4x2xf32>
    %119 = arith.addf %115, %117 : vector<4x4x2xf32>
    %120 = tpu.concatenate %118, %118, %118, %118, %118, %118, %118, %118 in 2 : vector<4x4x2xf32>, vector<4x4x2xf32>, vector<4x4x2xf32>, vector<4x4x2xf32>, vector<4x4x2xf32>, vector<4x4x2xf32>, vector<4x4x2xf32>, vector<4x4x2xf32> -> vector<4x4x16xf32>
    %121 = arith.mulf %99, %120 : vector<4x4x16xf32>
    %cst_24 = arith.constant dense<0.000000e+00> : vector<16xf32>
    %122 = vector.multi_reduction <add>, %121, %cst_24 [0, 1] : vector<4x4x16xf32> to vector<16xf32>
    %123 = vector.shape_cast %122 : vector<16xf32> to vector<1x1x16xf32>
    %124 = tpu.concatenate %109, %123 in 0 : vector<1x1x16xf32>, vector<1x1x16xf32> -> vector<2x1x16xf32>
    %cst_25 = arith.constant dense<0xFF800000> : vector<1x16xf32>
    %125 = vector.multi_reduction <maximumf>, %124, %cst_25 [0] : vector<2x1x16xf32> to vector<1x16xf32>
    %126 = vector.shape_cast %125 : vector<1x16xf32> to vector<1x1x16xf32>
    %127 = vector.broadcast %126 : vector<1x1x16xf32> to vector<2x1x16xf32>
    %128 = arith.subf %124, %127 : vector<2x1x16xf32>
    %129 = math.exp %128 : vector<2x1x16xf32>
    %cst_26 = arith.constant dense<0.000000e+00> : vector<1x16xf32>
    %130 = vector.multi_reduction <add>, %129, %cst_26 [0] : vector<2x1x16xf32> to vector<1x16xf32>
    %131 = vector.shape_cast %130 : vector<1x16xf32> to vector<1x1x16xf32>
    %132 = vector.broadcast %131 : vector<1x1x16xf32> to vector<2x1x16xf32>
    %133 = arith.divf %129, %132 : vector<2x1x16xf32>
    %134 = tpu.concatenate %105, %105, %105, %105, %105, %105, %105, %105 in 2 : vector<4x4x2xf32>, vector<4x4x2xf32>, vector<4x4x2xf32>, vector<4x4x2xf32>, vector<4x4x2xf32>, vector<4x4x2xf32>, vector<4x4x2xf32>, vector<4x4x2xf32> -> vector<4x4x16xf32>
    %135 = vector.extract_strided_slice %133 {offsets = [0, 0, 0], sizes = [1, 1, 16], strides = [1, 1, 1]} : vector<2x1x16xf32> to vector<1x1x16xf32>
    %136 = vector.broadcast %135 : vector<1x1x16xf32> to vector<4x4x16xf32>
    %137 = arith.mulf %136, %134 : vector<4x4x16xf32>
    %138 = tpu.concatenate %119, %119, %119, %119, %119, %119, %119, %119 in 2 : vector<4x4x2xf32>, vector<4x4x2xf32>, vector<4x4x2xf32>, vector<4x4x2xf32>, vector<4x4x2xf32>, vector<4x4x2xf32>, vector<4x4x2xf32>, vector<4x4x2xf32> -> vector<4x4x16xf32>
    %139 = vector.extract_strided_slice %133 {offsets = [1, 0, 0], sizes = [1, 1, 16], strides = [1, 1, 1]} : vector<2x1x16xf32> to vector<1x1x16xf32>
    %140 = vector.broadcast %139 : vector<1x1x16xf32> to vector<4x4x16xf32>
    %141 = arith.mulf %140, %138 : vector<4x4x16xf32>
    %142 = arith.addf %137, %141 : vector<4x4x16xf32>
    %143 = vector.extract_strided_slice %66 {offsets = [0, 0, 16], sizes = [4, 4, 16], strides = [1, 1, 1]} : vector<4x4x96xf32> to vector<4x4x16xf32>
    %144 = vector.extract_strided_slice %78 {offsets = [0, 0, 16], sizes = [4, 4, 2], strides = [1, 1, 1]} : vector<4x4x32xf32> to vector<4x4x2xf32>
    %145 = vector.extract_strided_slice %93 {offsets = [0, 0, 16], sizes = [4, 4, 2], strides = [1, 1, 1]} : vector<4x4x32xf32> to vector<4x4x2xf32>
    %146 = vector.extract_strided_slice %83 {offsets = [0, 0, 18], sizes = [4, 4, 2], strides = [1, 1, 1]} : vector<4x4x32xf32> to vector<4x4x2xf32>
    %147 = vector.extract_strided_slice %98 {offsets = [0, 0, 18], sizes = [4, 4, 2], strides = [1, 1, 1]} : vector<4x4x32xf32> to vector<4x4x2xf32>
    %148 = arith.addf %144, %146 : vector<4x4x2xf32>
    %149 = arith.addf %145, %147 : vector<4x4x2xf32>
    %150 = tpu.concatenate %148, %148, %148, %148, %148, %148, %148, %148 in 2 : vector<4x4x2xf32>, vector<4x4x2xf32>, vector<4x4x2xf32>, vector<4x4x2xf32>, vector<4x4x2xf32>, vector<4x4x2xf32>, vector<4x4x2xf32>, vector<4x4x2xf32> -> vector<4x4x16xf32>
    %151 = arith.mulf %143, %150 : vector<4x4x16xf32>
    %cst_27 = arith.constant dense<0.000000e+00> : vector<16xf32>
    %152 = vector.multi_reduction <add>, %151, %cst_27 [0, 1] : vector<4x4x16xf32> to vector<16xf32>
    %153 = vector.shape_cast %152 : vector<16xf32> to vector<1x1x16xf32>
    %154 = vector.extract_strided_slice %73 {offsets = [0, 0, 22], sizes = [4, 4, 2], strides = [1, 1, 1]} : vector<4x4x32xf32> to vector<4x4x2xf32>
    %155 = vector.extract_strided_slice %88 {offsets = [0, 0, 22], sizes = [4, 4, 2], strides = [1, 1, 1]} : vector<4x4x32xf32> to vector<4x4x2xf32>
    %156 = vector.extract_strided_slice %78 {offsets = [0, 0, 24], sizes = [4, 4, 2], strides = [1, 1, 1]} : vector<4x4x32xf32> to vector<4x4x2xf32>
    %157 = vector.extract_strided_slice %93 {offsets = [0, 0, 24], sizes = [4, 4, 2], strides = [1, 1, 1]} : vector<4x4x32xf32> to vector<4x4x2xf32>
    %158 = arith.addf %154, %156 : vector<4x4x2xf32>
    %159 = arith.addf %155, %157 : vector<4x4x2xf32>
    %160 = vector.extract_strided_slice %83 {offsets = [0, 0, 26], sizes = [4, 4, 2], strides = [1, 1, 1]} : vector<4x4x32xf32> to vector<4x4x2xf32>
    %161 = vector.extract_strided_slice %98 {offsets = [0, 0, 26], sizes = [4, 4, 2], strides = [1, 1, 1]} : vector<4x4x32xf32> to vector<4x4x2xf32>
    %162 = arith.addf %158, %160 : vector<4x4x2xf32>
    %163 = arith.addf %159, %161 : vector<4x4x2xf32>
    %164 = tpu.concatenate %162, %162, %162, %162, %162, %162, %162, %162 in 2 : vector<4x4x2xf32>, vector<4x4x2xf32>, vector<4x4x2xf32>, vector<4x4x2xf32>, vector<4x4x2xf32>, vector<4x4x2xf32>, vector<4x4x2xf32>, vector<4x4x2xf32> -> vector<4x4x16xf32>
    %165 = arith.mulf %143, %164 : vector<4x4x16xf32>
    %cst_28 = arith.constant dense<0.000000e+00> : vector<16xf32>
    %166 = vector.multi_reduction <add>, %165, %cst_28 [0, 1] : vector<4x4x16xf32> to vector<16xf32>
    %167 = vector.shape_cast %166 : vector<16xf32> to vector<1x1x16xf32>
    %168 = tpu.concatenate %153, %167 in 0 : vector<1x1x16xf32>, vector<1x1x16xf32> -> vector<2x1x16xf32>
    %cst_29 = arith.constant dense<0xFF800000> : vector<1x16xf32>
    %169 = vector.multi_reduction <maximumf>, %168, %cst_29 [0] : vector<2x1x16xf32> to vector<1x16xf32>
    %170 = vector.shape_cast %169 : vector<1x16xf32> to vector<1x1x16xf32>
    %171 = vector.broadcast %170 : vector<1x1x16xf32> to vector<2x1x16xf32>
    %172 = arith.subf %168, %171 : vector<2x1x16xf32>
    %173 = math.exp %172 : vector<2x1x16xf32>
    %cst_30 = arith.constant dense<0.000000e+00> : vector<1x16xf32>
    %174 = vector.multi_reduction <add>, %173, %cst_30 [0] : vector<2x1x16xf32> to vector<1x16xf32>
    %175 = vector.shape_cast %174 : vector<1x16xf32> to vector<1x1x16xf32>
    %176 = vector.broadcast %175 : vector<1x1x16xf32> to vector<2x1x16xf32>
    %177 = arith.divf %173, %176 : vector<2x1x16xf32>
    %178 = tpu.concatenate %149, %149, %149, %149, %149, %149, %149, %149 in 2 : vector<4x4x2xf32>, vector<4x4x2xf32>, vector<4x4x2xf32>, vector<4x4x2xf32>, vector<4x4x2xf32>, vector<4x4x2xf32>, vector<4x4x2xf32>, vector<4x4x2xf32> -> vector<4x4x16xf32>
    %179 = vector.extract_strided_slice %177 {offsets = [0, 0, 0], sizes = [1, 1, 16], strides = [1, 1, 1]} : vector<2x1x16xf32> to vector<1x1x16xf32>
    %180 = vector.broadcast %179 : vector<1x1x16xf32> to vector<4x4x16xf32>
    %181 = arith.mulf %180, %178 : vector<4x4x16xf32>
    %182 = tpu.concatenate %163, %163, %163, %163, %163, %163, %163, %163 in 2 : vector<4x4x2xf32>, vector<4x4x2xf32>, vector<4x4x2xf32>, vector<4x4x2xf32>, vector<4x4x2xf32>, vector<4x4x2xf32>, vector<4x4x2xf32>, vector<4x4x2xf32> -> vector<4x4x16xf32>
    %183 = vector.extract_strided_slice %177 {offsets = [1, 0, 0], sizes = [1, 1, 16], strides = [1, 1, 1]} : vector<2x1x16xf32> to vector<1x1x16xf32>
    %184 = vector.broadcast %183 : vector<1x1x16xf32> to vector<4x4x16xf32>
    %185 = arith.mulf %184, %182 : vector<4x4x16xf32>
    %186 = arith.addf %181, %185 : vector<4x4x16xf32>
    %cst_31 = arith.constant 0.000000e+00 : f32
    %187 = vector.broadcast %cst_31 : f32 to vector<2x6x6x16xf32>
    %c0_32 = arith.constant 0 : index
    %c0_33 = arith.constant 0 : index
    %c0_34 = arith.constant 0 : index
    %c0_35 = arith.constant 0 : index
    %188 = vector.load %arg8[%c0_32, %c0_33, %c0_34, %c0_35] : memref<2x6x6x16xf32, #tpu.memory_space<vmem>>, vector<2x6x6x16xf32>
    tpu.vector_store %arg8[%c0_32, %c0_33, %c0_34, %c0_35], %187 {strides = array<i32>} : memref<2x6x6x16xf32, #tpu.memory_space<vmem>>, vector<2x6x6x16xf32>,
    %c0_36 = arith.constant 0 : index
    %c1_37 = arith.constant 1 : index
    %c1_38 = arith.constant 1 : index
    %c0_39 = arith.constant 0 : index
    %189 = vector.load %arg8[%c0_36, %c1_37, %c1_38, %c0_39] : memref<2x6x6x16xf32, #tpu.memory_space<vmem>>, vector<1x4x4x16xf32>
    %190 = vector.shape_cast %189 : vector<1x4x4x16xf32> to vector<4x4x16xf32>
    %191 = vector.shape_cast %142 : vector<4x4x16xf32> to vector<1x4x4x16xf32>
    tpu.vector_store %arg8[%c0_36, %c1_37, %c1_38, %c0_39], %191 {strides = array<i32>} : memref<2x6x6x16xf32, #tpu.memory_space<vmem>>, vector<1x4x4x16xf32>,
    %c1_40 = arith.constant 1 : index
    %c1_41 = arith.constant 1 : index
    %c1_42 = arith.constant 1 : index
    %c0_43 = arith.constant 0 : index
    %192 = vector.load %arg8[%c1_40, %c1_41, %c1_42, %c0_43] : memref<2x6x6x16xf32, #tpu.memory_space<vmem>>, vector<1x4x4x16xf32>
    %193 = vector.shape_cast %192 : vector<1x4x4x16xf32> to vector<4x4x16xf32>
    %194 = vector.shape_cast %186 : vector<4x4x16xf32> to vector<1x4x4x16xf32>
    tpu.vector_store %arg8[%c1_40, %c1_41, %c1_42, %c0_43], %194 {strides = array<i32>} : memref<2x6x6x16xf32, #tpu.memory_space<vmem>>, vector<1x4x4x16xf32>,
    %c0_44 = arith.constant 0 : index
    %c0_45 = arith.constant 0 : index
    %c0_46 = arith.constant 0 : index
    %c0_47 = arith.constant 0 : index
    %195 = vector.load %arg8[%c0_44, %c0_45, %c0_46, %c0_47] : memref<2x6x6x16xf32, #tpu.memory_space<vmem>>, vector<1x6x6x16xf32>
    %196 = vector.shape_cast %195 : vector<1x6x6x16xf32> to vector<6x6x16xf32>
    %c1_48 = arith.constant 1 : index
    %c0_49 = arith.constant 0 : index
    %c0_50 = arith.constant 0 : index
    %c0_51 = arith.constant 0 : index
    %197 = vector.load %arg8[%c1_48, %c0_49, %c0_50, %c0_51] : memref<2x6x6x16xf32, #tpu.memory_space<vmem>>, vector<1x6x6x16xf32>
    %198 = vector.shape_cast %197 : vector<1x6x6x16xf32> to vector<6x6x16xf32>
    %199 = tpu.concatenate %196, %198 in 2 : vector<6x6x16xf32>, vector<6x6x16xf32> -> vector<6x6x32xf32>
    %200 = vector.extract_strided_slice %199 {offsets = [0, 0, 0], sizes = [6, 4, 32], strides = [1, 1, 1]} : vector<6x6x32xf32> to vector<6x4x32xf32>
    %201 = vector.extract_strided_slice %199 {offsets = [0, 1, 0], sizes = [6, 4, 32], strides = [1, 1, 1]} : vector<6x6x32xf32> to vector<6x4x32xf32>
    %202 = vector.extract_strided_slice %199 {offsets = [0, 2, 0], sizes = [6, 4, 32], strides = [1, 1, 1]} : vector<6x6x32xf32> to vector<6x4x32xf32>
    %c0_52 = arith.constant 0 : index
    %c0_53 = arith.constant 0 : index
    %203 = vector.load %arg4[%c0_52, %c0_53] : memref<9x32xf32, #tpu.memory_space<vmem>>, vector<1x32xf32>
    %204 = vector.shape_cast %203 : vector<1x32xf32> to vector<32xf32>
    %205 = vector.shape_cast %204 : vector<32xf32> to vector<1x1x32xf32>
    %206 = vector.extract_strided_slice %200 {offsets = [0, 0, 0], sizes = [4, 4, 32], strides = [1, 1, 1]} : vector<6x4x32xf32> to vector<4x4x32xf32>
    %207 = vector.broadcast %205 : vector<1x1x32xf32> to vector<4x4x32xf32>
    %208 = arith.mulf %207, %206 : vector<4x4x32xf32>
    %c1_54 = arith.constant 1 : index
    %c0_55 = arith.constant 0 : index
    %209 = vector.load %arg4[%c1_54, %c0_55] : memref<9x32xf32, #tpu.memory_space<vmem>>, vector<1x32xf32>
    %210 = vector.shape_cast %209 : vector<1x32xf32> to vector<32xf32>
    %211 = vector.shape_cast %210 : vector<32xf32> to vector<1x1x32xf32>
    %212 = vector.extract_strided_slice %201 {offsets = [0, 0, 0], sizes = [4, 4, 32], strides = [1, 1, 1]} : vector<6x4x32xf32> to vector<4x4x32xf32>
    %213 = vector.broadcast %211 : vector<1x1x32xf32> to vector<4x4x32xf32>
    %214 = arith.mulf %213, %212 : vector<4x4x32xf32>
    %215 = arith.addf %208, %214 : vector<4x4x32xf32>
    %c2_56 = arith.constant 2 : index
    %c0_57 = arith.constant 0 : index
    %216 = vector.load %arg4[%c2_56, %c0_57] : memref<9x32xf32, #tpu.memory_space<vmem>>, vector<1x32xf32>
    %217 = vector.shape_cast %216 : vector<1x32xf32> to vector<32xf32>
    %218 = vector.shape_cast %217 : vector<32xf32> to vector<1x1x32xf32>
    %219 = vector.extract_strided_slice %202 {offsets = [0, 0, 0], sizes = [4, 4, 32], strides = [1, 1, 1]} : vector<6x4x32xf32> to vector<4x4x32xf32>
    %220 = vector.broadcast %218 : vector<1x1x32xf32> to vector<4x4x32xf32>
    %221 = arith.mulf %220, %219 : vector<4x4x32xf32>
    %222 = arith.addf %215, %221 : vector<4x4x32xf32>
    %c3_58 = arith.constant 3 : index
    %c0_59 = arith.constant 0 : index
    %223 = vector.load %arg4[%c3_58, %c0_59] : memref<9x32xf32, #tpu.memory_space<vmem>>, vector<1x32xf32>
    %224 = vector.shape_cast %223 : vector<1x32xf32> to vector<32xf32>
    %225 = vector.shape_cast %224 : vector<32xf32> to vector<1x1x32xf32>
    %226 = vector.extract_strided_slice %200 {offsets = [1, 0, 0], sizes = [4, 4, 32], strides = [1, 1, 1]} : vector<6x4x32xf32> to vector<4x4x32xf32>
    %227 = vector.broadcast %225 : vector<1x1x32xf32> to vector<4x4x32xf32>
    %228 = arith.mulf %227, %226 : vector<4x4x32xf32>
    %229 = arith.addf %222, %228 : vector<4x4x32xf32>
    %c4_60 = arith.constant 4 : index
    %c0_61 = arith.constant 0 : index
    %230 = vector.load %arg4[%c4_60, %c0_61] : memref<9x32xf32, #tpu.memory_space<vmem>>, vector<1x32xf32>
    %231 = vector.shape_cast %230 : vector<1x32xf32> to vector<32xf32>
    %232 = vector.shape_cast %231 : vector<32xf32> to vector<1x1x32xf32>
    %233 = vector.extract_strided_slice %201 {offsets = [1, 0, 0], sizes = [4, 4, 32], strides = [1, 1, 1]} : vector<6x4x32xf32> to vector<4x4x32xf32>
    %234 = vector.broadcast %232 : vector<1x1x32xf32> to vector<4x4x32xf32>
    %235 = arith.mulf %234, %233 : vector<4x4x32xf32>
    %236 = arith.addf %229, %235 : vector<4x4x32xf32>
    %c5_62 = arith.constant 5 : index
    %c0_63 = arith.constant 0 : index
    %237 = vector.load %arg4[%c5_62, %c0_63] : memref<9x32xf32, #tpu.memory_space<vmem>>, vector<1x32xf32>
    %238 = vector.shape_cast %237 : vector<1x32xf32> to vector<32xf32>
    %239 = vector.shape_cast %238 : vector<32xf32> to vector<1x1x32xf32>
    %240 = vector.extract_strided_slice %202 {offsets = [1, 0, 0], sizes = [4, 4, 32], strides = [1, 1, 1]} : vector<6x4x32xf32> to vector<4x4x32xf32>
    %241 = vector.broadcast %239 : vector<1x1x32xf32> to vector<4x4x32xf32>
    %242 = arith.mulf %241, %240 : vector<4x4x32xf32>
    %243 = arith.addf %236, %242 : vector<4x4x32xf32>
    %c6_64 = arith.constant 6 : index
    %c0_65 = arith.constant 0 : index
    %244 = vector.load %arg4[%c6_64, %c0_65] : memref<9x32xf32, #tpu.memory_space<vmem>>, vector<1x32xf32>
    %245 = vector.shape_cast %244 : vector<1x32xf32> to vector<32xf32>
    %246 = vector.shape_cast %245 : vector<32xf32> to vector<1x1x32xf32>
    %247 = vector.extract_strided_slice %200 {offsets = [2, 0, 0], sizes = [4, 4, 32], strides = [1, 1, 1]} : vector<6x4x32xf32> to vector<4x4x32xf32>
    %248 = vector.broadcast %246 : vector<1x1x32xf32> to vector<4x4x32xf32>
    %249 = arith.mulf %248, %247 : vector<4x4x32xf32>
    %250 = arith.addf %243, %249 : vector<4x4x32xf32>
    %c7_66 = arith.constant 7 : index
    %c0_67 = arith.constant 0 : index
    %251 = vector.load %arg4[%c7_66, %c0_67] : memref<9x32xf32, #tpu.memory_space<vmem>>, vector<1x32xf32>
    %252 = vector.shape_cast %251 : vector<1x32xf32> to vector<32xf32>
    %253 = vector.shape_cast %252 : vector<32xf32> to vector<1x1x32xf32>
    %254 = vector.extract_strided_slice %201 {offsets = [2, 0, 0], sizes = [4, 4, 32], strides = [1, 1, 1]} : vector<6x4x32xf32> to vector<4x4x32xf32>
    %255 = vector.broadcast %253 : vector<1x1x32xf32> to vector<4x4x32xf32>
    %256 = arith.mulf %255, %254 : vector<4x4x32xf32>
    %257 = arith.addf %250, %256 : vector<4x4x32xf32>
    %c8_68 = arith.constant 8 : index
    %c0_69 = arith.constant 0 : index
    %258 = vector.load %arg4[%c8_68, %c0_69] : memref<9x32xf32, #tpu.memory_space<vmem>>, vector<1x32xf32>
    %259 = vector.shape_cast %258 : vector<1x32xf32> to vector<32xf32>
    %260 = vector.shape_cast %259 : vector<32xf32> to vector<1x1x32xf32>
    %261 = vector.extract_strided_slice %202 {offsets = [2, 0, 0], sizes = [4, 4, 32], strides = [1, 1, 1]} : vector<6x4x32xf32> to vector<4x4x32xf32>
    %262 = vector.broadcast %260 : vector<1x1x32xf32> to vector<4x4x32xf32>
    %263 = arith.mulf %262, %261 : vector<4x4x32xf32>
    %264 = arith.addf %257, %263 : vector<4x4x32xf32>
    %265 = vector.extract_strided_slice %264 {offsets = [0, 0, 0], sizes = [4, 4, 16], strides = [1, 1, 1]} : vector<4x4x32xf32> to vector<4x4x16xf32>
    %266 = vector.extract_strided_slice %264 {offsets = [0, 0, 16], sizes = [4, 4, 16], strides = [1, 1, 1]} : vector<4x4x32xf32> to vector<4x4x16xf32>
    %267 = arith.addf %265, %266 : vector<4x4x16xf32>
    %cst_70 = arith.constant dense<0.000000e+00> : vector<16xf32>
    %268 = vector.multi_reduction <add>, %267, %cst_70 [0, 1] : vector<4x4x16xf32> to vector<16xf32>
    %269 = vector.shape_cast %268 : vector<16xf32> to vector<1x1x16xf32>
    %cst_71 = arith.constant 1.600000e+01 : f32
    %270 = vector.broadcast %cst_71 : f32 to vector<1x1x16xf32>
    %271 = arith.divf %269, %270 : vector<1x1x16xf32>
    %272 = vector.broadcast %271 : vector<1x1x16xf32> to vector<4x4x16xf32>
    %273 = arith.subf %267, %272 : vector<4x4x16xf32>
    %274 = arith.mulf %273, %273 : vector<4x4x16xf32>
    %cst_72 = arith.constant dense<0.000000e+00> : vector<16xf32>
    %275 = vector.multi_reduction <add>, %274, %cst_72 [0, 1] : vector<4x4x16xf32> to vector<16xf32>
    %276 = vector.shape_cast %275 : vector<16xf32> to vector<1x1x16xf32>
    %cst_73 = arith.constant 1.600000e+01 : f32
    %277 = vector.broadcast %cst_73 : f32 to vector<1x1x16xf32>
    %278 = arith.divf %276, %277 : vector<1x1x16xf32>
    %279 = vector.broadcast %271 : vector<1x1x16xf32> to vector<4x4x16xf32>
    %280 = arith.subf %267, %279 : vector<4x4x16xf32>
    %cst_74 = arith.constant 9.99999974E-6 : f32
    %281 = vector.broadcast %cst_74 : f32 to vector<1x1x16xf32>
    %282 = arith.addf %278, %281 : vector<1x1x16xf32>
    %283 = math.sqrt %282 : vector<1x1x16xf32>
    %284 = vector.broadcast %283 : vector<1x1x16xf32> to vector<4x4x16xf32>
    %285 = arith.divf %280, %284 : vector<4x4x16xf32>
    %c0_75 = arith.constant 0 : index
    %c0_76 = arith.constant 0 : index
    %c0_77 = arith.constant 0 : index
    %286 = vector.load %arg5[%c0_75, %c0_76, %c0_77] : memref<4x4x16xf32, #tpu.memory_space<vmem>>, vector<4x4x16xf32>
    %287 = arith.mulf %285, %286 : vector<4x4x16xf32>
    %c0_78 = arith.constant 0 : index
    %c0_79 = arith.constant 0 : index
    %c0_80 = arith.constant 0 : index
    %288 = vector.load %arg6[%c0_78, %c0_79, %c0_80] : memref<4x4x16xf32, #tpu.memory_space<vmem>>, vector<4x4x16xf32>
    %289 = arith.addf %287, %288 : vector<4x4x16xf32>
    %c0_81 = arith.constant 0 : index
    %c0_82 = arith.constant 0 : index
    %c0_83 = arith.constant 0 : index
    %290 = vector.load %arg7[%c0_81, %c0_82, %c0_83] : memref<4x4x16xf32, #tpu.memory_space<vmem>>, vector<4x4x16xf32>
    tpu.vector_store %arg7[%c0_81, %c0_82, %c0_83], %289 {strides = array<i32>} : memref<4x4x16xf32, #tpu.memory_space<vmem>>, vector<4x4x16xf32>,
    return
  }
}

</mosaic_0001>

<llo_original>
// kernel: squeeze.6
$region0: #{squeeze.6}
  %s0 = inlined_call_operand.vmem [shape: f32[6,3,3], index: 0, kind: input, shape index: {}]
  %s1 = inlined_call_operand.vmem [shape: f32[6,9], index: 1, kind: output, shape index: {}]
  $region1: #{squeeze.6} parent=0
    #allocation0 [shape = 'u8[12288]{0}', space=vmem, size = 0x3000, scoped, tag = 'scoped mem for input reshape']
    %s3 = ssub.s32 16, 1
    %s4 = scalar_lea.vmem %s0, 8
    %v5 = vld [vmem:[%s4] sm:%s3]
    %s6 = scalar_lea.vmem [#allocation0], 16
    %7 = vst [vmem:[%s6] sm:%s3] %v5
    %s8 = scalar_lea.vmem %s0, 4
    %v9 = vld [vmem:[%s8] sm:%s3]
    %s10 = scalar_lea.vmem [#allocation0], 8
    %11 = vst [vmem:[%s10] sm:%s3] %v9
    %v12 = vld [vmem:[%s0] sm:%s3]
    %13 = vst [vmem:[#allocation0] sm:%s3] %v12
    %v14 = vld [vmem:[#allocation0] sm:$0x7]
    %vm15 = vcmask 48128
    %16 = vst.msk [vmem:[%s1] sm:$0x7] %vm15, %v14
    %s17 = scalar_lea.vmem [#allocation0], 8
    %v18 = vld [vmem:[%s17] sm:$0x7]
    %vm19 = vcmask 48128
    %s20 = scalar_lea.vmem %s1, 3
    %21 = vst.msk [vmem:[%s20] sm:$0x7] %vm19, %v18
    %s22 = scalar_lea.vmem [#allocation0], 16
    %v23 = vld [vmem:[%s22] sm:$0x7]
    %vm24 = vcmask 48128
    %s25 = scalar_lea.vmem %s1, 6
    %26 = vst.msk [vmem:[%s25] sm:$0x7] %vm24, %v23

// kernel: squeeze.9
$region0: #{squeeze.9}
  %s0 = inlined_call_operand.vmem [shape: f32[2,3,3], index: 0, kind: input, shape index: {}]
  %s1 = inlined_call_operand.vmem [shape: f32[2,9], index: 1, kind: output, shape index: {}]
  $region1: #{squeeze.9} parent=0
    #allocation0 [shape = 'u8[4096]{0}', space=vmem, size = 0x1000, scoped, tag = 'scoped mem for output reshape']
    #allocation1 [shape = 'u8[8192]{0}', space=vmem, size = 0x2000, scoped, tag = 'scoped mem for input reshape']
    %s3 = ssub.s32 16, 1
    %s4 = scalar_lea.vmem %s0, 4
    %v5 = vld [vmem:[%s4] sm:%s3]
    %s6 = scalar_lea.vmem [#allocation1], 8
    %7 = vst [vmem:[%s6] sm:%s3] %v5
    %v8 = vld [vmem:[%s0] sm:%s3]
    %9 = vst [vmem:[#allocation1] sm:%s3] %v8
    %s10 = smov 3
    %v11 = vld [vmem:[#allocation1] ss:$8 sm:%s10]
    %vm12 = vcmask 23552
    %13 = vst.msk [vmem:[#allocation0] sm:$0x3] %vm12, %v11
    %s14 = scalar_lea.vmem [#allocation1], 2
    %s15 = smov 3
    %v16 = vld [vmem:[%s14] ss:$8 sm:%s15]
    %17 = vrot.lane.b32.xlu0 %v16, 6
    %v18 = vpop.permute.xlu0 %17
    %vm19 = vcmask 72752
    %20 = vst.msk [vmem:[#allocation0] sm:$0x3] %vm19, %v18
    %s21 = scalar_lea.vmem [#allocation1], 1
    %s22 = smov 3
    %v23 = vld [vmem:[%s21] ss:$8 sm:%s22]
    %24 = vrot.lane.b32.xlu0 %v23, 3
    %v25 = vpop.permute.xlu0 %24
    %vm26 = vcmask 48152
    %27 = vst.msk [vmem:[#allocation0] sm:$0x3] %vm26, %v25
    %s29 = ssub.s32 4, 1
    %v30 = vld [vmem:[#allocation0] sm:%s29]
    %s32 = ssub.s32 4, 1
    %33 = vst [vmem:[%s1] sm:%s32] %v30

// kernel: attention_forward.1
$region0: #{attention_forward.1}
  #allocation0 [shape = 'u32[]', space=smem, size = 0x4, offset = 0x4, fixed_abs, tag = 'smem constant byte address 0x4 - core index']
  #allocation1 [shape = 'u32[72,128]{1,0:T(1,128)}', space=vmem, size = 0x9000, scoped, tag = 'internal scratch']
  #allocation2 [shape = 'f32[2,6,6,16]{3,2,1,0:T(8,128)}', space=vmem, size = 0xc000, scoped, tag = 'scratch operand']
  %s0 = inlined_call_operand.vmem [shape: f32[6,6,16], index: 0, kind: input, shape index: {}]
  %s1 = inlined_call_operand.vmem [shape: f32[9,96], index: 1, kind: input, shape index: {}]
  %s2 = inlined_call_operand.vmem [shape: f32[3,32], index: 2, kind: input, shape index: {}]
  %s3 = inlined_call_operand.vmem [shape: f32[3,32], index: 3, kind: input, shape index: {}]
  %s4 = inlined_call_operand.vmem [shape: f32[9,32], index: 4, kind: input, shape index: {}]
  %s5 = inlined_call_operand.vmem [shape: f32[4,4,16], index: 5, kind: input, shape index: {}]
  %s6 = inlined_call_operand.vmem [shape: f32[4,4,16], index: 6, kind: input, shape index: {}]
  %s7 = inlined_call_operand.vmem [shape: f32[4,4,16], index: 7, kind: output, shape index: {}]
  %s8 = sld [smem:[#allocation0]]
  $region38: #{attention_forward.1} parent=0
    _
  %s10 = ssub.s32 1, %s8
  %s11 = scalar_select 0, %s10, %s8
  // Predicated region
  $region2: #{attention_forward.1} parent=0 // pred_check
    _
  $region3: #{attention_forward.1} parent=0 // pred_check_branch
    %13 = sbr.rel (0) target = $region5
  $region4: #{attention_forward.1} parent=0 // pred_region
    _
  $region5: #{attention_forward.1} parent=0 // pred_fallthru
    _
  // Predicated region
  $region6: #{attention_forward.1} parent=0 // pred_check
    _
  $region7: #{attention_forward.1} parent=0 // pred_check_branch
    %15 = sbr.rel (0) target = $region9
  $region8: #{attention_forward.1} parent=0 // pred_region
    _
  $region9: #{attention_forward.1} parent=0 // pred_fallthru
    _
  // Predicated region
  $region10: #{attention_forward.1} parent=0 // pred_check
    _
  $region11: #{attention_forward.1} parent=0 // pred_check_branch
    %17 = sbr.rel (0) target = $region13
  $region12: #{attention_forward.1} parent=0 // pred_region
    _
  $region13: #{attention_forward.1} parent=0 // pred_fallthru
    _
  // Predicated region
  $region14: #{attention_forward.1} parent=0 // pred_check
    _
  $region15: #{attention_forward.1} parent=0 // pred_check_branch
    %19 = sbr.rel (0) target = $region17
  $region16: #{attention_forward.1} parent=0 // pred_region
    _
  $region17: #{attention_forward.1} parent=0 // pred_fallthru
    _
  // Predicated region
  $region18: #{attention_forward.1} parent=0 // pred_check
    _
  $region19: #{attention_forward.1} parent=0 // pred_check_branch
    %21 = sbr.rel (0) target = $region21
  $region20: #{attention_forward.1} parent=0 // pred_region
    _
  $region21: #{attention_forward.1} parent=0 // pred_fallthru
    _
  // Predicated region
  $region22: #{attention_forward.1} parent=0 // pred_check
    _
  $region23: #{attention_forward.1} parent=0 // pred_check_branch
    %23 = sbr.rel (0) target = $region25
  $region24: #{attention_forward.1} parent=0 // pred_region
    _
  $region25: #{attention_forward.1} parent=0 // pred_fallthru
    _
  // Predicated region
  $region26: #{attention_forward.1} parent=0 // pred_check
    _
  $region27: #{attention_forward.1} parent=0 // pred_check_branch
    %25 = sbr.rel (0) target = $region29
  $region28: #{attention_forward.1} parent=0 // pred_region
    _
  $region29: #{attention_forward.1} parent=0 // pred_fallthru
    _
  %v26 = vld [vmem:[%s0] sm:$0x3f]
  %v27 = vld [vmem:[%s0 + $0x8] sm:$0x3f]
  %v28 = vld [vmem:[%s0 + $0x10] sm:$0x3f]
  %v29 = vld [vmem:[%s0 + $0x18] sm:$0x3f]
  %v30 = vld [vmem:[%s0 + $0x20] sm:$0x3f]
  %v31 = vld [vmem:[%s0 + $0x28] sm:$0x3f]
  %38 = vrot.lane.b32.xlu0 %v26, 16
  %v39 = vpop.permute.xlu0 %38
  %40 = vrot.lane.b32.xlu0 %v27, 16
  %v41 = vpop.permute.xlu0 %40
  %42 = vrot.lane.b32.xlu0 %v28, 16
  %v43 = vpop.permute.xlu0 %42
  %44 = vrot.lane.b32.xlu0 %v29, 16
  %v45 = vpop.permute.xlu0 %44
  %46 = vrot.lane.b32.xlu0 %v30, 16
  %v47 = vpop.permute.xlu0 %46
  %48 = vrot.lane.b32.xlu0 %v31, 16
  %v49 = vpop.permute.xlu0 %48
  %56 = vrot.lane.b32.xlu0 %v26, 32
  %v57 = vpop.permute.xlu0 %56
  %58 = vrot.lane.b32.xlu0 %v27, 32
  %v59 = vpop.permute.xlu0 %58
  %60 = vrot.lane.b32.xlu0 %v28, 32
  %v61 = vpop.permute.xlu0 %60
  %62 = vrot.lane.b32.xlu0 %v29, 32
  %v63 = vpop.permute.xlu0 %62
  %64 = vrot.lane.b32.xlu0 %v30, 32
  %v65 = vpop.permute.xlu0 %64
  %66 = vrot.lane.b32.xlu0 %v31, 32
  %v67 = vpop.permute.xlu0 %66
  %74 = vrot.lane.b32.xlu0 %v26, 48
  %v75 = vpop.permute.xlu0 %74
  %76 = vrot.lane.b32.xlu0 %v27, 48
  %v77 = vpop.permute.xlu0 %76
  %78 = vrot.lane.b32.xlu0 %v28, 48
  %v79 = vpop.permute.xlu0 %78
  %80 = vrot.lane.b32.xlu0 %v29, 48
  %v81 = vpop.permute.xlu0 %80
  %82 = vrot.lane.b32.xlu0 %v30, 48
  %v83 = vpop.permute.xlu0 %82
  %84 = vrot.lane.b32.xlu0 %v31, 48
  %v85 = vpop.permute.xlu0 %84
  %92 = vrot.lane.b32.xlu0 %v26, 64
  %v93 = vpop.permute.xlu0 %92
  %94 = vrot.lane.b32.xlu0 %v27, 64
  %v95 = vpop.permute.xlu0 %94
  %96 = vrot.lane.b32.xlu0 %v28, 64
  %v97 = vpop.permute.xlu0 %96
  %98 = vrot.lane.b32.xlu0 %v29, 64
  %v99 = vpop.permute.xlu0 %98
  %100 = vrot.lane.b32.xlu0 %v30, 64
  %v101 = vpop.permute.xlu0 %100
  %102 = vrot.lane.b32.xlu0 %v31, 64
  %v103 = vpop.permute.xlu0 %102
  %110 = vrot.lane.b32.xlu0 %v26, 80
  %v111 = vpop.permute.xlu0 %110
  %112 = vrot.lane.b32.xlu0 %v27, 80
  %v113 = vpop.permute.xlu0 %112
  %114 = vrot.lane.b32.xlu0 %v28, 80
  %v115 = vpop.permute.xlu0 %114
  %116 = vrot.lane.b32.xlu0 %v29, 80
  %v117 = vpop.permute.xlu0 %116
  %118 = vrot.lane.b32.xlu0 %v30, 80
  %v119 = vpop.permute.xlu0 %118
  %120 = vrot.lane.b32.xlu0 %v31, 80
  %v121 = vpop.permute.xlu0 %120
  %vm128 = vcmask 130048
  %v129 = vsel %vm128, %v26, %v39
  %v130 = vsel %vm128, %v27, %v41
  %v131 = vsel %vm128, %v28, %v43
  %v132 = vsel %vm128, %v29, %v45
  %v133 = vsel %vm128, %v30, %v47
  %v134 = vsel %vm128, %v31, %v49
  %vm135 = vcmask 261120
  %v136 = vsel %vm135, %v129, %v57
  %v137 = vsel %vm135, %v130, %v59
  %v138 = vsel %vm135, %v131, %v61
  %v139 = vsel %vm135, %v132, %v63
  %v140 = vsel %vm135, %v133, %v65
  %v141 = vsel %vm135, %v134, %v67
  %vm142 = vcmask 392192
  %v143 = vsel %vm142, %v136, %v75
  %v144 = vsel %vm142, %v137, %v77
  %v145 = vsel %vm142, %v138, %v79
  %v146 = vsel %vm142, %v139, %v81
  %v147 = vsel %vm142, %v140, %v83
  %v148 = vsel %vm142, %v141, %v85
  %vm149 = vcmask 523264
  %v150 = vsel %vm149, %v143, %v93
  %v151 = vsel %vm149, %v144, %v95
  %v152 = vsel %vm149, %v145, %v97
  %v153 = vsel %vm149, %v146, %v99
  %v154 = vsel %vm149, %v147, %v101
  %v155 = vsel %vm149, %v148, %v103
  %vm156 = vcmask 654336
  %v157 = vsel %vm156, %v150, %v111
  %v158 = vsel %vm156, %v151, %v113
  %v159 = vsel %vm156, %v152, %v115
  %v160 = vsel %vm156, %v153, %v117
  %v161 = vsel %vm156, %v154, %v119
  %v162 = vsel %vm156, %v155, %v121
  %v163 = vld [vmem:[%s1] sm:$0x1]
  %v164 = vperm.slane %v163, 0
  %v165 = vmul.f32 %v164, %v157
  %v166 = vmul.f32 %v164, %v158
  %v167 = vmul.f32 %v164, %v159
  %v168 = vmul.f32 %v164, %v160
  %v169 = vld [vmem:[%s1 + $0x1] sm:$0x1]
  %v170 = vperm.slane %v169, 0
  %v171 = vmul.f32 %v170, %v157
  %v172 = vmul.f32 %v170, %v158
  %v173 = vmul.f32 %v170, %v159
  %v174 = vmul.f32 %v170, %v160
  %v179 = vrot.slane %v171, 1
  %v180 = vrot.slane %v172, 1
  %v181 = vrot.slane %v173, 1
  %v182 = vrot.slane %v174, 1
  %v187 = vadd.f32 %v165, %v179
  %v188 = vadd.f32 %v166, %v180
  %v189 = vadd.f32 %v167, %v181
  %v190 = vadd.f32 %v168, %v182
  %v191 = vld [vmem:[%s1 + $0x2] sm:$0x1]
  %v192 = vperm.slane %v191, 0
  %v193 = vmul.f32 %v192, %v157
  %v194 = vmul.f32 %v192, %v158
  %v195 = vmul.f32 %v192, %v159
  %v196 = vmul.f32 %v192, %v160
  %v201 = vrot.slane %v193, 2
  %v202 = vrot.slane %v194, 2
  %v203 = vrot.slane %v195, 2
  %v204 = vrot.slane %v196, 2
  %v209 = vadd.f32 %v187, %v201
  %v210 = vadd.f32 %v188, %v202
  %v211 = vadd.f32 %v189, %v203
  %v212 = vadd.f32 %v190, %v204
  %v213 = vld [vmem:[%s1 + $0x3] sm:$0x1]
  %v214 = vperm.slane %v213, 0
  %v215 = vmul.f32 %v214, %v158
  %v216 = vmul.f32 %v214, %v159
  %v217 = vmul.f32 %v214, %v160
  %v218 = vmul.f32 %v214, %v161
  %v219 = vadd.f32 %v209, %v215
  %v220 = vadd.f32 %v210, %v216
  %v221 = vadd.f32 %v211, %v217
  %v222 = vadd.f32 %v212, %v218
  %v223 = vld [vmem:[%s1 + $0x4] sm:$0x1]
  %v224 = vperm.slane %v223, 0
  %v225 = vmul.f32 %v224, %v158
  %v226 = vmul.f32 %v224, %v159
  %v227 = vmul.f32 %v224, %v160
  %v228 = vmul.f32 %v224, %v161
  %v233 = vrot.slane %v225, 1
  %v234 = vrot.slane %v226, 1
  %v235 = vrot.slane %v227, 1
  %v236 = vrot.slane %v228, 1
  %v241 = vadd.f32 %v219, %v233
  %v242 = vadd.f32 %v220, %v234
  %v243 = vadd.f32 %v221, %v235
  %v244 = vadd.f32 %v222, %v236
  %v245 = vld [vmem:[%s1 + $0x5] sm:$0x1]
  %v246 = vperm.slane %v245, 0
  %v247 = vmul.f32 %v246, %v158
  %v248 = vmul.f32 %v246, %v159
  %v249 = vmul.f32 %v246, %v160
  %v250 = vmul.f32 %v246, %v161
  %v255 = vrot.slane %v247, 2
  %v256 = vrot.slane %v248, 2
  %v257 = vrot.slane %v249, 2
  %v258 = vrot.slane %v250, 2
  %v263 = vadd.f32 %v241, %v255
  %v264 = vadd.f32 %v242, %v256
  %v265 = vadd.f32 %v243, %v257
  %v266 = vadd.f32 %v244, %v258
  %v267 = vld [vmem:[%s1 + $0x6] sm:$0x1]
  %v268 = vperm.slane %v267, 0
  %v269 = vmul.f32 %v268, %v159
  %v270 = vmul.f32 %v268, %v160
  %v271 = vmul.f32 %v268, %v161
  %v272 = vmul.f32 %v268, %v162
  %v273 = vadd.f32 %v263, %v269
  %v274 = vadd.f32 %v264, %v270
  %v275 = vadd.f32 %v265, %v271
  %v276 = vadd.f32 %v266, %v272
  %v277 = vld [vmem:[%s1 + $0x7] sm:$0x1]
  %v278 = vperm.slane %v277, 0
  %v279 = vmul.f32 %v278, %v159
  %v280 = vmul.f32 %v278, %v160
  %v281 = vmul.f32 %v278, %v161
  %v282 = vmul.f32 %v278, %v162
  %v287 = vrot.slane %v279, 1
  %v288 = vrot.slane %v280, 1
  %v289 = vrot.slane %v281, 1
  %v290 = vrot.slane %v282, 1
  %v295 = vadd.f32 %v273, %v287
  %v296 = vadd.f32 %v274, %v288
  %v297 = vadd.f32 %v275, %v289
  %v298 = vadd.f32 %v276, %v290
  %v299 = vld [vmem:[%s1 + $0x8] sm:$0x1]
  %v300 = vperm.slane %v299, 0
  %v301 = vmul.f32 %v300, %v159
  %v302 = vmul.f32 %v300, %v160
  %v303 = vmul.f32 %v300, %v161
  %v304 = vmul.f32 %v300, %v162
  %v309 = vrot.slane %v301, 2
  %v310 = vrot.slane %v302, 2
  %v311 = vrot.slane %v303, 2
  %v312 = vrot.slane %v304, 2
  %v317 = vadd.f32 %v295, %v309
  %v318 = vadd.f32 %v296, %v310
  %v319 = vadd.f32 %v297, %v311
  %v320 = vadd.f32 %v298, %v312
  %v321 = vld [vmem:[%s2] sm:$0x1]
  %v322 = vperm.slane %v321, 0
  %327 = vrot.lane.b32.xlu0 %v317, 96
  %v328 = vpop.permute.xlu0 %327
  %329 = vrot.lane.b32.xlu0 %v318, 96
  %v330 = vpop.permute.xlu0 %329
  %331 = vrot.lane.b32.xlu0 %v319, 96
  %v332 = vpop.permute.xlu0 %331
  %333 = vrot.lane.b32.xlu0 %v320, 96
  %v334 = vpop.permute.xlu0 %333
  %v339 = vmul.f32 %v322, %v328
  %v340 = vmul.f32 %v322, %v330
  %v341 = vmul.f32 %v322, %v332
  %v342 = vmul.f32 %v322, %v334
  %v343 = vld [vmem:[%s2 + $0x1] sm:$0x1]
  %v344 = vperm.slane %v343, 0
  %v345 = vmul.f32 %v344, %v328
  %v346 = vmul.f32 %v344, %v330
  %v347 = vmul.f32 %v344, %v332
  %v348 = vmul.f32 %v344, %v334
  %v349 = vld [vmem:[%s2 + $0x2] sm:$0x1]
  %v350 = vperm.slane %v349, 0
  %v351 = vmul.f32 %v350, %v328
  %v352 = vmul.f32 %v350, %v330
  %v353 = vmul.f32 %v350, %v332
  %v354 = vmul.f32 %v350, %v334
  %v355 = vld [vmem:[%s3] sm:$0x1]
  %v356 = vperm.slane %v355, 0
  %357 = vrot.lane.b32.xlu0 %v317, 64
  %v358 = vpop.permute.xlu0 %357
  %359 = vrot.lane.b32.xlu0 %v318, 64
  %v360 = vpop.permute.xlu0 %359
  %361 = vrot.lane.b32.xlu0 %v319, 64
  %v362 = vpop.permute.xlu0 %361
  %363 = vrot.lane.b32.xlu0 %v320, 64
  %v364 = vpop.permute.xlu0 %363
  %v369 = vmul.f32 %v356, %v358
  %v370 = vmul.f32 %v356, %v360
  %v371 = vmul.f32 %v356, %v362
  %v372 = vmul.f32 %v356, %v364
  %v373 = vld [vmem:[%s3 + $0x1] sm:$0x1]
  %v374 = vperm.slane %v373, 0
  %v375 = vmul.f32 %v374, %v358
  %v376 = vmul.f32 %v374, %v360
  %v377 = vmul.f32 %v374, %v362
  %v378 = vmul.f32 %v374, %v364
  %v379 = vld [vmem:[%s3 + $0x2] sm:$0x1]
  %v380 = vperm.slane %v379, 0
  %v381 = vmul.f32 %v380, %v358
  %v382 = vmul.f32 %v380, %v360
  %v383 = vmul.f32 %v380, %v362
  %v384 = vmul.f32 %v380, %v364
  %389 = vrot.lane.b32.xlu0 %v351, 126
  %v390 = vpop.permute.xlu0 %389
  %391 = vrot.lane.b32.xlu0 %v352, 126
  %v392 = vpop.permute.xlu0 %391
  %393 = vrot.lane.b32.xlu0 %v353, 126
  %v394 = vpop.permute.xlu0 %393
  %395 = vrot.lane.b32.xlu0 %v354, 126
  %v396 = vpop.permute.xlu0 %395
  %v401 = vadd.f32 %v345, %v390
  %v402 = vadd.f32 %v346, %v392
  %v403 = vadd.f32 %v347, %v394
  %v404 = vadd.f32 %v348, %v396
  %409 = vrot.lane.b32.xlu0 %v381, 126
  %v410 = vpop.permute.xlu0 %409
  %411 = vrot.lane.b32.xlu0 %v382, 126
  %v412 = vpop.permute.xlu0 %411
  %413 = vrot.lane.b32.xlu0 %v383, 126
  %v414 = vpop.permute.xlu0 %413
  %415 = vrot.lane.b32.xlu0 %v384, 126
  %v416 = vpop.permute.xlu0 %415
  %v421 = vadd.f32 %v375, %v410
  %v422 = vadd.f32 %v376, %v412
  %v423 = vadd.f32 %v377, %v414
  %v424 = vadd.f32 %v378, %v416
  %429 = vrot.lane.b32.xlu0 %v401, 2
  %v430 = vpop.permute.xlu0 %429
  %431 = vrot.lane.b32.xlu0 %v402, 2
  %v432 = vpop.permute.xlu0 %431
  %433 = vrot.lane.b32.xlu0 %v403, 2
  %v434 = vpop.permute.xlu0 %433
  %435 = vrot.lane.b32.xlu0 %v404, 2
  %v436 = vpop.permute.xlu0 %435
  %441 = vrot.lane.b32.xlu0 %v401, 4
  %v442 = vpop.permute.xlu0 %441
  %443 = vrot.lane.b32.xlu0 %v402, 4
  %v444 = vpop.permute.xlu0 %443
  %445 = vrot.lane.b32.xlu0 %v403, 4
  %v446 = vpop.permute.xlu0 %445
  %447 = vrot.lane.b32.xlu0 %v404, 4
  %v448 = vpop.permute.xlu0 %447
  %453 = vrot.lane.b32.xlu0 %v401, 6
  %v454 = vpop.permute.xlu0 %453
  %455 = vrot.lane.b32.xlu0 %v402, 6
  %v456 = vpop.permute.xlu0 %455
  %457 = vrot.lane.b32.xlu0 %v403, 6
  %v458 = vpop.permute.xlu0 %457
  %459 = vrot.lane.b32.xlu0 %v404, 6
  %v460 = vpop.permute.xlu0 %459
  %465 = vrot.lane.b32.xlu0 %v401, 8
  %v466 = vpop.permute.xlu0 %465
  %467 = vrot.lane.b32.xlu0 %v402, 8
  %v468 = vpop.permute.xlu0 %467
  %469 = vrot.lane.b32.xlu0 %v403, 8
  %v470 = vpop.permute.xlu0 %469
  %471 = vrot.lane.b32.xlu0 %v404, 8
  %v472 = vpop.permute.xlu0 %471
  %477 = vrot.lane.b32.xlu0 %v401, 10
  %v478 = vpop.permute.xlu0 %477
  %479 = vrot.lane.b32.xlu0 %v402, 10
  %v480 = vpop.permute.xlu0 %479
  %481 = vrot.lane.b32.xlu0 %v403, 10
  %v482 = vpop.permute.xlu0 %481
  %483 = vrot.lane.b32.xlu0 %v404, 10
  %v484 = vpop.permute.xlu0 %483
  %489 = vrot.lane.b32.xlu0 %v401, 12
  %v490 = vpop.permute.xlu0 %489
  %491 = vrot.lane.b32.xlu0 %v402, 12
  %v492 = vpop.permute.xlu0 %491
  %493 = vrot.lane.b32.xlu0 %v403, 12
  %v494 = vpop.permute.xlu0 %493
  %495 = vrot.lane.b32.xlu0 %v404, 12
  %v496 = vpop.permute.xlu0 %495
  %501 = vrot.lane.b32.xlu0 %v401, 14
  %v502 = vpop.permute.xlu0 %501
  %503 = vrot.lane.b32.xlu0 %v402, 14
  %v504 = vpop.permute.xlu0 %503
  %505 = vrot.lane.b32.xlu0 %v403, 14
  %v506 = vpop.permute.xlu0 %505
  %507 = vrot.lane.b32.xlu0 %v404, 14
  %v508 = vpop.permute.xlu0 %507
  %vm513 = vcmask 15360
  %v514 = vsel %vm513, %v401, %v430
  %v515 = vsel %vm513, %v402, %v432
  %v516 = vsel %vm513, %v403, %v434
  %v517 = vsel %vm513, %v404, %v436
  %vm518 = vcmask 31744
  %v519 = vsel %vm518, %v514, %v442
  %v520 = vsel %vm518, %v515, %v444
  %v521 = vsel %vm518, %v516, %v446
  %v522 = vsel %vm518, %v517, %v448
  %vm523 = vcmask 48128
  %v524 = vsel %vm523, %v519, %v454
  %v525 = vsel %vm523, %v520, %v456
  %v526 = vsel %vm523, %v521, %v458
  %v527 = vsel %vm523, %v522, %v460
  %vm528 = vcmask 64512
  %v529 = vsel %vm528, %v524, %v466
  %v530 = vsel %vm528, %v525, %v468
  %v531 = vsel %vm528, %v526, %v470
  %v532 = vsel %vm528, %v527, %v472
  %vm533 = vcmask 80896
  %v534 = vsel %vm533, %v529, %v478
  %v535 = vsel %vm533, %v530, %v480
  %v536 = vsel %vm533, %v531, %v482
  %v537 = vsel %vm533, %v532, %v484
  %vm538 = vcmask 97280
  %v539 = vsel %vm538, %v534, %v490
  %v540 = vsel %vm538, %v535, %v492
  %v541 = vsel %vm538, %v536, %v494
  %v542 = vsel %vm538, %v537, %v496
  %vm543 = vcmask 113664
  %v544 = vsel %vm543, %v539, %v502
  %v545 = vsel %vm543, %v540, %v504
  %v546 = vsel %vm543, %v541, %v506
  %v547 = vsel %vm543, %v542, %v508
  %v548 = vmul.f32 %v317, %v544
  %v549 = vmul.f32 %v318, %v545
  %v550 = vmul.f32 %v319, %v546
  %v551 = vmul.f32 %v320, %v547
  %vm552 = vcmask 125952
  %v553 = vsel %vm552, %v548, 0.0
  %v554 = vsel %vm552, %v549, 0.0
  %v555 = vadd.f32 %v553, %v554
  %v556 = vsel %vm552, %v550, 0.0
  %v557 = vadd.f32 %v555, %v556
  %v558 = vsel %vm552, %v551, 0.0
  %v559 = vadd.f32 %v557, %v558
  %v560 = vrot.slane %v559, 4
  %v561 = vadd.f32 %v559, %v560
  %v562 = vrot.slane %v561, 2
  %v563 = vadd.f32 %v561, %v562
  %v564 = vrot.slane %v563, 1
  %v565 = vadd.f32 %v563, %v564
  %570 = vrot.lane.b32.xlu0 %v345, 126
  %v571 = vpop.permute.xlu0 %570
  %572 = vrot.lane.b32.xlu0 %v346, 126
  %v573 = vpop.permute.xlu0 %572
  %574 = vrot.lane.b32.xlu0 %v347, 126
  %v575 = vpop.permute.xlu0 %574
  %576 = vrot.lane.b32.xlu0 %v348, 126
  %v577 = vpop.permute.xlu0 %576
  %v582 = vadd.f32 %v339, %v571
  %v583 = vadd.f32 %v340, %v573
  %v584 = vadd.f32 %v341, %v575
  %v585 = vadd.f32 %v342, %v577
  %590 = vrot.lane.b32.xlu0 %v375, 126
  %v591 = vpop.permute.xlu0 %590
  %592 = vrot.lane.b32.xlu0 %v376, 126
  %v593 = vpop.permute.xlu0 %592
  %594 = vrot.lane.b32.xlu0 %v377, 126
  %v595 = vpop.permute.xlu0 %594
  %596 = vrot.lane.b32.xlu0 %v378, 126
  %v597 = vpop.permute.xlu0 %596
  %v602 = vadd.f32 %v369, %v591
  %v603 = vadd.f32 %v370, %v593
  %v604 = vadd.f32 %v371, %v595
  %v605 = vadd.f32 %v372, %v597
  %606 = vrot.lane.b32.xlu0 %v351, 124
  %v607 = vpop.permute.xlu0 %606
  %608 = vrot.lane.b32.xlu0 %v352, 124
  %v609 = vpop.permute.xlu0 %608
  %610 = vrot.lane.b32.xlu0 %v353, 124
  %v611 = vpop.permute.xlu0 %610
  %612 = vrot.lane.b32.xlu0 %v354, 124
  %v613 = vpop.permute.xlu0 %612
  %v618 = vadd.f32 %v582, %v607
  %v619 = vadd.f32 %v583, %v609
  %v620 = vadd.f32 %v584, %v611
  %v621 = vadd.f32 %v585, %v613
  %622 = vrot.lane.b32.xlu0 %v381, 124
  %v623 = vpop.permute.xlu0 %622
  %624 = vrot.lane.b32.xlu0 %v382, 124
  %v625 = vpop.permute.xlu0 %624
  %626 = vrot.lane.b32.xlu0 %v383, 124
  %v627 = vpop.permute.xlu0 %626
  %628 = vrot.lane.b32.xlu0 %v384, 124
  %v629 = vpop.permute.xlu0 %628
  %v634 = vadd.f32 %v602, %v623
  %v635 = vadd.f32 %v603, %v625
  %v636 = vadd.f32 %v604, %v627
  %v637 = vadd.f32 %v605, %v629
  %642 = vrot.lane.b32.xlu0 %v618, 122
  %v643 = vpop.permute.xlu0 %642
  %644 = vrot.lane.b32.xlu0 %v619, 122
  %v645 = vpop.permute.xlu0 %644
  %646 = vrot.lane.b32.xlu0 %v620, 122
  %v647 = vpop.permute.xlu0 %646
  %648 = vrot.lane.b32.xlu0 %v621, 122
  %v649 = vpop.permute.xlu0 %648
  %654 = vrot.lane.b32.xlu0 %v618, 124
  %v655 = vpop.permute.xlu0 %654
  %656 = vrot.lane.b32.xlu0 %v619, 124
  %v657 = vpop.permute.xlu0 %656
  %658 = vrot.lane.b32.xlu0 %v620, 124
  %v659 = vpop.permute.xlu0 %658
  %660 = vrot.lane.b32.xlu0 %v621, 124
  %v661 = vpop.permute.xlu0 %660
  %666 = vrot.lane.b32.xlu0 %v618, 126
  %v667 = vpop.permute.xlu0 %666
  %668 = vrot.lane.b32.xlu0 %v619, 126
  %v669 = vpop.permute.xlu0 %668
  %670 = vrot.lane.b32.xlu0 %v620, 126
  %v671 = vpop.permute.xlu0 %670
  %672 = vrot.lane.b32.xlu0 %v621, 126
  %v673 = vpop.permute.xlu0 %672
  %678 = vrot.lane.b32.xlu0 %v618, 2
  %v679 = vpop.permute.xlu0 %678
  %680 = vrot.lane.b32.xlu0 %v619, 2
  %v681 = vpop.permute.xlu0 %680
  %682 = vrot.lane.b32.xlu0 %v620, 2
  %v683 = vpop.permute.xlu0 %682
  %684 = vrot.lane.b32.xlu0 %v621, 2
  %v685 = vpop.permute.xlu0 %684
  %690 = vrot.lane.b32.xlu0 %v618, 4
  %v691 = vpop.permute.xlu0 %690
  %692 = vrot.lane.b32.xlu0 %v619, 4
  %v693 = vpop.permute.xlu0 %692
  %694 = vrot.lane.b32.xlu0 %v620, 4
  %v695 = vpop.permute.xlu0 %694
  %696 = vrot.lane.b32.xlu0 %v621, 4
  %v697 = vpop.permute.xlu0 %696
  %702 = vrot.lane.b32.xlu0 %v618, 6
  %v703 = vpop.permute.xlu0 %702
  %704 = vrot.lane.b32.xlu0 %v619, 6
  %v705 = vpop.permute.xlu0 %704
  %706 = vrot.lane.b32.xlu0 %v620, 6
  %v707 = vpop.permute.xlu0 %706
  %708 = vrot.lane.b32.xlu0 %v621, 6
  %v709 = vpop.permute.xlu0 %708
  %714 = vrot.lane.b32.xlu0 %v618, 8
  %v715 = vpop.permute.xlu0 %714
  %716 = vrot.lane.b32.xlu0 %v619, 8
  %v717 = vpop.permute.xlu0 %716
  %718 = vrot.lane.b32.xlu0 %v620, 8
  %v719 = vpop.permute.xlu0 %718
  %720 = vrot.lane.b32.xlu0 %v621, 8
  %v721 = vpop.permute.xlu0 %720
  %v726 = vsel %vm513, %v643, %v655
  %v727 = vsel %vm513, %v645, %v657
  %v728 = vsel %vm513, %v647, %v659
  %v729 = vsel %vm513, %v649, %v661
  %v730 = vsel %vm518, %v726, %v667
  %v731 = vsel %vm518, %v727, %v669
  %v732 = vsel %vm518, %v728, %v671
  %v733 = vsel %vm518, %v729, %v673
  %v734 = vsel %vm523, %v730, %v618
  %v735 = vsel %vm523, %v731, %v619
  %v736 = vsel %vm523, %v732, %v620
  %v737 = vsel %vm523, %v733, %v621
  %v738 = vsel %vm528, %v734, %v679
  %v739 = vsel %vm528, %v735, %v681
  %v740 = vsel %vm528, %v736, %v683
  %v741 = vsel %vm528, %v737, %v685
  %v742 = vsel %vm533, %v738, %v691
  %v743 = vsel %vm533, %v739, %v693
  %v744 = vsel %vm533, %v740, %v695
  %v745 = vsel %vm533, %v741, %v697
  %v746 = vsel %vm538, %v742, %v703
  %v747 = vsel %vm538, %v743, %v705
  %v748 = vsel %vm538, %v744, %v707
  %v749 = vsel %vm538, %v745, %v709
  %v750 = vsel %vm543, %v746, %v715
  %v751 = vsel %vm543, %v747, %v717
  %v752 = vsel %vm543, %v748, %v719
  %v753 = vsel %vm543, %v749, %v721
  %v754 = vmul.f32 %v317, %v750
  %v755 = vmul.f32 %v318, %v751
  %v756 = vmul.f32 %v319, %v752
  %v757 = vmul.f32 %v320, %v753
  %v758 = vsel %vm552, %v754, 0.0
  %v759 = vsel %vm552, %v755, 0.0
  %v760 = vadd.f32 %v758, %v759
  %v761 = vsel %vm552, %v756, 0.0
  %v762 = vadd.f32 %v760, %v761
  %v763 = vsel %vm552, %v757, 0.0
  %v764 = vadd.f32 %v762, %v763
  %v765 = vrot.slane %v764, 4
  %v766 = vadd.f32 %v764, %v765
  %v767 = vrot.slane %v766, 2
  %v768 = vadd.f32 %v766, %v767
  %v769 = vrot.slane %v768, 1
  %v770 = vadd.f32 %v768, %v769
  %vm771 = vcmask 122880
  %v772 = vsel %vm771, %v565, -inf
  %v773 = vsel %vm771, %v770, -inf
  %v774 = vmax.f32 %v772, %v773
  %v775 = vsub.f32 %v565, %v774
  %v776 = vsub.f32 %v770, %v774
  %v777 = vmul.f32 %v775, 1.442695
  %v778 = vpow.pop %v777
  %v779 = vmul.f32 %v776, 1.442695
  %v780 = vpow.pop %v779
  %v781 = vsel %vm771, %v778, 0.0
  %v782 = vsel %vm771, %v780, 0.0
  %v783 = vadd.f32 %v781, %v782
  %v784 = vrcp.pop %v783
  %v785 = vmul.f32 %v783, %v784
  %v786 = vsub.f32 1.0, %v785
  %v787 = vmul.f32 %v784, %v786
  %v788 = vadd.f32 %v784, %v787
  %vm789 = vweird.f32 %v783
  %vm790 = vweird.f32 %v784
  %vm791 = vmor %vm789, %vm790
  %v792 = vsel %vm791, %v784, %v788
  %v793 = vand.u32 2147483647, %v783
  %vm794 = vcmp.eq.f32.partialorder %v793, 8.507059e+37
  %v795 = vand.u32 %v783, 2147483648
  %v796 = vor.u32 1.1754944e-38, %v795
  %v797 = vsel %vm794, %v796, %v792
  %v798 = vmul.f32 %v778, %v797
  %v799 = vmul.f32 %v780, %v797
  %804 = vrot.lane.b32.xlu0 %v421, 2
  %v805 = vpop.permute.xlu0 %804
  %806 = vrot.lane.b32.xlu0 %v422, 2
  %v807 = vpop.permute.xlu0 %806
  %808 = vrot.lane.b32.xlu0 %v423, 2
  %v809 = vpop.permute.xlu0 %808
  %810 = vrot.lane.b32.xlu0 %v424, 2
  %v811 = vpop.permute.xlu0 %810
  %816 = vrot.lane.b32.xlu0 %v421, 4
  %v817 = vpop.permute.xlu0 %816
  %818 = vrot.lane.b32.xlu0 %v422, 4
  %v819 = vpop.permute.xlu0 %818
  %820 = vrot.lane.b32.xlu0 %v423, 4
  %v821 = vpop.permute.xlu0 %820
  %822 = vrot.lane.b32.xlu0 %v424, 4
  %v823 = vpop.permute.xlu0 %822
  %828 = vrot.lane.b32.xlu0 %v421, 6
  %v829 = vpop.permute.xlu0 %828
  %830 = vrot.lane.b32.xlu0 %v422, 6
  %v831 = vpop.permute.xlu0 %830
  %832 = vrot.lane.b32.xlu0 %v423, 6
  %v833 = vpop.permute.xlu0 %832
  %834 = vrot.lane.b32.xlu0 %v424, 6
  %v835 = vpop.permute.xlu0 %834
  %840 = vrot.lane.b32.xlu0 %v421, 8
  %v841 = vpop.permute.xlu0 %840
  %842 = vrot.lane.b32.xlu0 %v422, 8
  %v843 = vpop.permute.xlu0 %842
  %844 = vrot.lane.b32.xlu0 %v423, 8
  %v845 = vpop.permute.xlu0 %844
  %846 = vrot.lane.b32.xlu0 %v424, 8
  %v847 = vpop.permute.xlu0 %846
  %852 = vrot.lane.b32.xlu0 %v421, 10
  %v853 = vpop.permute.xlu0 %852
  %854 = vrot.lane.b32.xlu0 %v422, 10
  %v855 = vpop.permute.xlu0 %854
  %856 = vrot.lane.b32.xlu0 %v423, 10
  %v857 = vpop.permute.xlu0 %856
  %858 = vrot.lane.b32.xlu0 %v424, 10
  %v859 = vpop.permute.xlu0 %858
  %864 = vrot.lane.b32.xlu0 %v421, 12
  %v865 = vpop.permute.xlu0 %864
  %866 = vrot.lane.b32.xlu0 %v422, 12
  %v867 = vpop.permute.xlu0 %866
  %868 = vrot.lane.b32.xlu0 %v423, 12
  %v869 = vpop.permute.xlu0 %868
  %870 = vrot.lane.b32.xlu0 %v424, 12
  %v871 = vpop.permute.xlu0 %870
  %876 = vrot.lane.b32.xlu0 %v421, 14
  %v877 = vpop.permute.xlu0 %876
  %878 = vrot.lane.b32.xlu0 %v422, 14
  %v879 = vpop.permute.xlu0 %878
  %880 = vrot.lane.b32.xlu0 %v423, 14
  %v881 = vpop.permute.xlu0 %880
  %882 = vrot.lane.b32.xlu0 %v424, 14
  %v883 = vpop.permute.xlu0 %882
  %v888 = vsel %vm513, %v421, %v805
  %v889 = vsel %vm513, %v422, %v807
  %v890 = vsel %vm513, %v423, %v809
  %v891 = vsel %vm513, %v424, %v811
  %v892 = vsel %vm518, %v888, %v817
  %v893 = vsel %vm518, %v889, %v819
  %v894 = vsel %vm518, %v890, %v821
  %v895 = vsel %vm518, %v891, %v823
  %v896 = vsel %vm523, %v892, %v829
  %v897 = vsel %vm523, %v893, %v831
  %v898 = vsel %vm523, %v894, %v833
  %v899 = vsel %vm523, %v895, %v835
  %v900 = vsel %vm528, %v896, %v841
  %v901 = vsel %vm528, %v897, %v843
  %v902 = vsel %vm528, %v898, %v845
  %v903 = vsel %vm528, %v899, %v847
  %v904 = vsel %vm533, %v900, %v853
  %v905 = vsel %vm533, %v901, %v855
  %v906 = vsel %vm533, %v902, %v857
  %v907 = vsel %vm533, %v903, %v859
  %v908 = vsel %vm538, %v904, %v865
  %v909 = vsel %vm538, %v905, %v867
  %v910 = vsel %vm538, %v906, %v869
  %v911 = vsel %vm538, %v907, %v871
  %v912 = vsel %vm543, %v908, %v877
  %v913 = vsel %vm543, %v909, %v879
  %v914 = vsel %vm543, %v910, %v881
  %v915 = vsel %vm543, %v911, %v883
  %v916 = vperm.slane %v798, 0
  %v917 = vmul.f32 %v916, %v912
  %v918 = vmul.f32 %v916, %v913
  %v919 = vmul.f32 %v916, %v914
  %v920 = vmul.f32 %v916, %v915
  %925 = vrot.lane.b32.xlu0 %v634, 122
  %v926 = vpop.permute.xlu0 %925
  %927 = vrot.lane.b32.xlu0 %v635, 122
  %v928 = vpop.permute.xlu0 %927
  %929 = vrot.lane.b32.xlu0 %v636, 122
  %v930 = vpop.permute.xlu0 %929
  %931 = vrot.lane.b32.xlu0 %v637, 122
  %v932 = vpop.permute.xlu0 %931
  %937 = vrot.lane.b32.xlu0 %v634, 124
  %v938 = vpop.permute.xlu0 %937
  %939 = vrot.lane.b32.xlu0 %v635, 124
  %v940 = vpop.permute.xlu0 %939
  %941 = vrot.lane.b32.xlu0 %v636, 124
  %v942 = vpop.permute.xlu0 %941
  %943 = vrot.lane.b32.xlu0 %v637, 124
  %v944 = vpop.permute.xlu0 %943
  %949 = vrot.lane.b32.xlu0 %v634, 126
  %v950 = vpop.permute.xlu0 %949
  %951 = vrot.lane.b32.xlu0 %v635, 126
  %v952 = vpop.permute.xlu0 %951
  %953 = vrot.lane.b32.xlu0 %v636, 126
  %v954 = vpop.permute.xlu0 %953
  %955 = vrot.lane.b32.xlu0 %v637, 126
  %v956 = vpop.permute.xlu0 %955
  %961 = vrot.lane.b32.xlu0 %v634, 2
  %v962 = vpop.permute.xlu0 %961
  %963 = vrot.lane.b32.xlu0 %v635, 2
  %v964 = vpop.permute.xlu0 %963
  %965 = vrot.lane.b32.xlu0 %v636, 2
  %v966 = vpop.permute.xlu0 %965
  %967 = vrot.lane.b32.xlu0 %v637, 2
  %v968 = vpop.permute.xlu0 %967
  %973 = vrot.lane.b32.xlu0 %v634, 4
  %v974 = vpop.permute.xlu0 %973
  %975 = vrot.lane.b32.xlu0 %v635, 4
  %v976 = vpop.permute.xlu0 %975
  %977 = vrot.lane.b32.xlu0 %v636, 4
  %v978 = vpop.permute.xlu0 %977
  %979 = vrot.lane.b32.xlu0 %v637, 4
  %v980 = vpop.permute.xlu0 %979
  %985 = vrot.lane.b32.xlu0 %v634, 6
  %v986 = vpop.permute.xlu0 %985
  %987 = vrot.lane.b32.xlu0 %v635, 6
  %v988 = vpop.permute.xlu0 %987
  %989 = vrot.lane.b32.xlu0 %v636, 6
  %v990 = vpop.permute.xlu0 %989
  %991 = vrot.lane.b32.xlu0 %v637, 6
  %v992 = vpop.permute.xlu0 %991
  %997 = vrot.lane.b32.xlu0 %v634, 8
  %v998 = vpop.permute.xlu0 %997
  %999 = vrot.lane.b32.xlu0 %v635, 8
  %v1000 = vpop.permute.xlu0 %999
  %1001 = vrot.lane.b32.xlu0 %v636, 8
  %v1002 = vpop.permute.xlu0 %1001
  %1003 = vrot.lane.b32.xlu0 %v637, 8
  %v1004 = vpop.permute.xlu0 %1003
  %v1009 = vsel %vm513, %v926, %v938
  %v1010 = vsel %vm513, %v928, %v940
  %v1011 = vsel %vm513, %v930, %v942
  %v1012 = vsel %vm513, %v932, %v944
  %v1013 = vsel %vm518, %v1009, %v950
  %v1014 = vsel %vm518, %v1010, %v952
  %v1015 = vsel %vm518, %v1011, %v954
  %v1016 = vsel %vm518, %v1012, %v956
  %v1017 = vsel %vm523, %v1013, %v634
  %v1018 = vsel %vm523, %v1014, %v635
  %v1019 = vsel %vm523, %v1015, %v636
  %v1020 = vsel %vm523, %v1016, %v637
  %v1021 = vsel %vm528, %v1017, %v962
  %v1022 = vsel %vm528, %v1018, %v964
  %v1023 = vsel %vm528, %v1019, %v966
  %v1024 = vsel %vm528, %v1020, %v968
  %v1025 = vsel %vm533, %v1021, %v974
  %v1026 = vsel %vm533, %v1022, %v976
  %v1027 = vsel %vm533, %v1023, %v978
  %v1028 = vsel %vm533, %v1024, %v980
  %v1029 = vsel %vm538, %v1025, %v986
  %v1030 = vsel %vm538, %v1026, %v988
  %v1031 = vsel %vm538, %v1027, %v990
  %v1032 = vsel %vm538, %v1028, %v992
  %v1033 = vsel %vm543, %v1029, %v998
  %v1034 = vsel %vm543, %v1030, %v1000
  %v1035 = vsel %vm543, %v1031, %v1002
  %v1036 = vsel %vm543, %v1032, %v1004
  %v1037 = vperm.slane %v799, 0
  %v1038 = vmul.f32 %v1037, %v1033
  %v1039 = vmul.f32 %v1037, %v1034
  %v1040 = vmul.f32 %v1037, %v1035
  %v1041 = vmul.f32 %v1037, %v1036
  %v1042 = vadd.f32 %v917, %v1038
  %v1043 = vadd.f32 %v918, %v1039
  %v1044 = vadd.f32 %v919, %v1040
  %v1045 = vadd.f32 %v920, %v1041
  %1046 = vrot.lane.b32.xlu0 %v401, 112
  %v1047 = vpop.permute.xlu0 %1046
  %1048 = vrot.lane.b32.xlu0 %v402, 112
  %v1049 = vpop.permute.xlu0 %1048
  %1050 = vrot.lane.b32.xlu0 %v403, 112
  %v1051 = vpop.permute.xlu0 %1050
  %1052 = vrot.lane.b32.xlu0 %v404, 112
  %v1053 = vpop.permute.xlu0 %1052
  %1058 = vrot.lane.b32.xlu0 %v401, 114
  %v1059 = vpop.permute.xlu0 %1058
  %1060 = vrot.lane.b32.xlu0 %v402, 114
  %v1061 = vpop.permute.xlu0 %1060
  %1062 = vrot.lane.b32.xlu0 %v403, 114
  %v1063 = vpop.permute.xlu0 %1062
  %1064 = vrot.lane.b32.xlu0 %v404, 114
  %v1065 = vpop.permute.xlu0 %1064
  %1070 = vrot.lane.b32.xlu0 %v401, 116
  %v1071 = vpop.permute.xlu0 %1070
  %1072 = vrot.lane.b32.xlu0 %v402, 116
  %v1073 = vpop.permute.xlu0 %1072
  %1074 = vrot.lane.b32.xlu0 %v403, 116
  %v1075 = vpop.permute.xlu0 %1074
  %1076 = vrot.lane.b32.xlu0 %v404, 116
  %v1077 = vpop.permute.xlu0 %1076
  %1082 = vrot.lane.b32.xlu0 %v401, 118
  %v1083 = vpop.permute.xlu0 %1082
  %1084 = vrot.lane.b32.xlu0 %v402, 118
  %v1085 = vpop.permute.xlu0 %1084
  %1086 = vrot.lane.b32.xlu0 %v403, 118
  %v1087 = vpop.permute.xlu0 %1086
  %1088 = vrot.lane.b32.xlu0 %v404, 118
  %v1089 = vpop.permute.xlu0 %1088
  %1094 = vrot.lane.b32.xlu0 %v401, 120
  %v1095 = vpop.permute.xlu0 %1094
  %1096 = vrot.lane.b32.xlu0 %v402, 120
  %v1097 = vpop.permute.xlu0 %1096
  %1098 = vrot.lane.b32.xlu0 %v403, 120
  %v1099 = vpop.permute.xlu0 %1098
  %1100 = vrot.lane.b32.xlu0 %v404, 120
  %v1101 = vpop.permute.xlu0 %1100
  %1106 = vrot.lane.b32.xlu0 %v401, 122
  %v1107 = vpop.permute.xlu0 %1106
  %1108 = vrot.lane.b32.xlu0 %v402, 122
  %v1109 = vpop.permute.xlu0 %1108
  %1110 = vrot.lane.b32.xlu0 %v403, 122
  %v1111 = vpop.permute.xlu0 %1110
  %1112 = vrot.lane.b32.xlu0 %v404, 122
  %v1113 = vpop.permute.xlu0 %1112
  %1118 = vrot.lane.b32.xlu0 %v401, 124
  %v1119 = vpop.permute.xlu0 %1118
  %1120 = vrot.lane.b32.xlu0 %v402, 124
  %v1121 = vpop.permute.xlu0 %1120
  %1122 = vrot.lane.b32.xlu0 %v403, 124
  %v1123 = vpop.permute.xlu0 %1122
  %1124 = vrot.lane.b32.xlu0 %v404, 124
  %v1125 = vpop.permute.xlu0 %1124
  %1130 = vrot.lane.b32.xlu0 %v401, 126
  %v1131 = vpop.permute.xlu0 %1130
  %1132 = vrot.lane.b32.xlu0 %v402, 126
  %v1133 = vpop.permute.xlu0 %1132
  %1134 = vrot.lane.b32.xlu0 %v403, 126
  %v1135 = vpop.permute.xlu0 %1134
  %1136 = vrot.lane.b32.xlu0 %v404, 126
  %v1137 = vpop.permute.xlu0 %1136
  %v1142 = vsel %vm513, %v1047, %v1059
  %v1143 = vsel %vm513, %v1049, %v1061
  %v1144 = vsel %vm513, %v1051, %v1063
  %v1145 = vsel %vm513, %v1053, %v1065
  %v1146 = vsel %vm518, %v1142, %v1071
  %v1147 = vsel %vm518, %v1143, %v1073
  %v1148 = vsel %vm518, %v1144, %v1075
  %v1149 = vsel %vm518, %v1145, %v1077
  %v1150 = vsel %vm523, %v1146, %v1083
  %v1151 = vsel %vm523, %v1147, %v1085
  %v1152 = vsel %vm523, %v1148, %v1087
  %v1153 = vsel %vm523, %v1149, %v1089
  %v1154 = vsel %vm528, %v1150, %v1095
  %v1155 = vsel %vm528, %v1151, %v1097
  %v1156 = vsel %vm528, %v1152, %v1099
  %v1157 = vsel %vm528, %v1153, %v1101
  %v1158 = vsel %vm533, %v1154, %v1107
  %v1159 = vsel %vm533, %v1155, %v1109
  %v1160 = vsel %vm533, %v1156, %v1111
  %v1161 = vsel %vm533, %v1157, %v1113
  %v1162 = vsel %vm538, %v1158, %v1119
  %v1163 = vsel %vm538, %v1159, %v1121
  %v1164 = vsel %vm538, %v1160, %v1123
  %v1165 = vsel %vm538, %v1161, %v1125
  %v1166 = vsel %vm543, %v1162, %v1131
  %v1167 = vsel %vm543, %v1163, %v1133
  %v1168 = vsel %vm543, %v1164, %v1135
  %v1169 = vsel %vm543, %v1165, %v1137
  %1174 = vrot.lane.b32.xlu0 %v1166, 16
  %v1175 = vpop.permute.xlu0 %1174
  %1176 = vrot.lane.b32.xlu0 %v1167, 16
  %v1177 = vpop.permute.xlu0 %1176
  %1178 = vrot.lane.b32.xlu0 %v1168, 16
  %v1179 = vpop.permute.xlu0 %1178
  %1180 = vrot.lane.b32.xlu0 %v1169, 16
  %v1181 = vpop.permute.xlu0 %1180
  %v1186 = vmul.f32 %v317, %v1175
  %v1187 = vmul.f32 %v318, %v1177
  %v1188 = vmul.f32 %v319, %v1179
  %v1189 = vmul.f32 %v320, %v1181
  %vm1190 = vcmask 257152
  %v1191 = vsel %vm1190, %v1186, 0.0
  %v1192 = vsel %vm1190, %v1187, 0.0
  %v1193 = vadd.f32 %v1191, %v1192
  %v1194 = vsel %vm1190, %v1188, 0.0
  %v1195 = vadd.f32 %v1193, %v1194
  %v1196 = vsel %vm1190, %v1189, 0.0
  %v1197 = vadd.f32 %v1195, %v1196
  %v1198 = vrot.slane %v1197, 4
  %v1199 = vadd.f32 %v1197, %v1198
  %v1200 = vrot.slane %v1199, 2
  %v1201 = vadd.f32 %v1199, %v1200
  %v1202 = vrot.slane %v1201, 1
  %v1203 = vadd.f32 %v1201, %v1202
  %1204 = vrot.lane.b32.xlu0 %v618, 106
  %v1205 = vpop.permute.xlu0 %1204
  %1206 = vrot.lane.b32.xlu0 %v619, 106
  %v1207 = vpop.permute.xlu0 %1206
  %1208 = vrot.lane.b32.xlu0 %v620, 106
  %v1209 = vpop.permute.xlu0 %1208
  %1210 = vrot.lane.b32.xlu0 %v621, 106
  %v1211 = vpop.permute.xlu0 %1210
  %1216 = vrot.lane.b32.xlu0 %v618, 108
  %v1217 = vpop.permute.xlu0 %1216
  %1218 = vrot.lane.b32.xlu0 %v619, 108
  %v1219 = vpop.permute.xlu0 %1218
  %1220 = vrot.lane.b32.xlu0 %v620, 108
  %v1221 = vpop.permute.xlu0 %1220
  %1222 = vrot.lane.b32.xlu0 %v621, 108
  %v1223 = vpop.permute.xlu0 %1222
  %1228 = vrot.lane.b32.xlu0 %v618, 110
  %v1229 = vpop.permute.xlu0 %1228
  %1230 = vrot.lane.b32.xlu0 %v619, 110
  %v1231 = vpop.permute.xlu0 %1230
  %1232 = vrot.lane.b32.xlu0 %v620, 110
  %v1233 = vpop.permute.xlu0 %1232
  %1234 = vrot.lane.b32.xlu0 %v621, 110
  %v1235 = vpop.permute.xlu0 %1234
  %1240 = vrot.lane.b32.xlu0 %v618, 112
  %v1241 = vpop.permute.xlu0 %1240
  %1242 = vrot.lane.b32.xlu0 %v619, 112
  %v1243 = vpop.permute.xlu0 %1242
  %1244 = vrot.lane.b32.xlu0 %v620, 112
  %v1245 = vpop.permute.xlu0 %1244
  %1246 = vrot.lane.b32.xlu0 %v621, 112
  %v1247 = vpop.permute.xlu0 %1246
  %1252 = vrot.lane.b32.xlu0 %v618, 114
  %v1253 = vpop.permute.xlu0 %1252
  %1254 = vrot.lane.b32.xlu0 %v619, 114
  %v1255 = vpop.permute.xlu0 %1254
  %1256 = vrot.lane.b32.xlu0 %v620, 114
  %v1257 = vpop.permute.xlu0 %1256
  %1258 = vrot.lane.b32.xlu0 %v621, 114
  %v1259 = vpop.permute.xlu0 %1258
  %1264 = vrot.lane.b32.xlu0 %v618, 116
  %v1265 = vpop.permute.xlu0 %1264
  %1266 = vrot.lane.b32.xlu0 %v619, 116
  %v1267 = vpop.permute.xlu0 %1266
  %1268 = vrot.lane.b32.xlu0 %v620, 116
  %v1269 = vpop.permute.xlu0 %1268
  %1270 = vrot.lane.b32.xlu0 %v621, 116
  %v1271 = vpop.permute.xlu0 %1270
  %1276 = vrot.lane.b32.xlu0 %v618, 118
  %v1277 = vpop.permute.xlu0 %1276
  %1278 = vrot.lane.b32.xlu0 %v619, 118
  %v1279 = vpop.permute.xlu0 %1278
  %1280 = vrot.lane.b32.xlu0 %v620, 118
  %v1281 = vpop.permute.xlu0 %1280
  %1282 = vrot.lane.b32.xlu0 %v621, 118
  %v1283 = vpop.permute.xlu0 %1282
  %1288 = vrot.lane.b32.xlu0 %v618, 120
  %v1289 = vpop.permute.xlu0 %1288
  %1290 = vrot.lane.b32.xlu0 %v619, 120
  %v1291 = vpop.permute.xlu0 %1290
  %1292 = vrot.lane.b32.xlu0 %v620, 120
  %v1293 = vpop.permute.xlu0 %1292
  %1294 = vrot.lane.b32.xlu0 %v621, 120
  %v1295 = vpop.permute.xlu0 %1294
  %v1300 = vsel %vm513, %v1205, %v1217
  %v1301 = vsel %vm513, %v1207, %v1219
  %v1302 = vsel %vm513, %v1209, %v1221
  %v1303 = vsel %vm513, %v1211, %v1223
  %v1304 = vsel %vm518, %v1300, %v1229
  %v1305 = vsel %vm518, %v1301, %v1231
  %v1306 = vsel %vm518, %v1302, %v1233
  %v1307 = vsel %vm518, %v1303, %v1235
  %v1308 = vsel %vm523, %v1304, %v1241
  %v1309 = vsel %vm523, %v1305, %v1243
  %v1310 = vsel %vm523, %v1306, %v1245
  %v1311 = vsel %vm523, %v1307, %v1247
  %v1312 = vsel %vm528, %v1308, %v1253
  %v1313 = vsel %vm528, %v1309, %v1255
  %v1314 = vsel %vm528, %v1310, %v1257
  %v1315 = vsel %vm528, %v1311, %v1259
  %v1316 = vsel %vm533, %v1312, %v1265
  %v1317 = vsel %vm533, %v1313, %v1267
  %v1318 = vsel %vm533, %v1314, %v1269
  %v1319 = vsel %vm533, %v1315, %v1271
  %v1320 = vsel %vm538, %v1316, %v1277
  %v1321 = vsel %vm538, %v1317, %v1279
  %v1322 = vsel %vm538, %v1318, %v1281
  %v1323 = vsel %vm538, %v1319, %v1283
  %v1324 = vsel %vm543, %v1320, %v1289
  %v1325 = vsel %vm543, %v1321, %v1291
  %v1326 = vsel %vm543, %v1322, %v1293
  %v1327 = vsel %vm543, %v1323, %v1295
  %1332 = vrot.lane.b32.xlu0 %v1324, 16
  %v1333 = vpop.permute.xlu0 %1332
  %1334 = vrot.lane.b32.xlu0 %v1325, 16
  %v1335 = vpop.permute.xlu0 %1334
  %1336 = vrot.lane.b32.xlu0 %v1326, 16
  %v1337 = vpop.permute.xlu0 %1336
  %1338 = vrot.lane.b32.xlu0 %v1327, 16
  %v1339 = vpop.permute.xlu0 %1338
  %v1344 = vmul.f32 %v317, %v1333
  %v1345 = vmul.f32 %v318, %v1335
  %v1346 = vmul.f32 %v319, %v1337
  %v1347 = vmul.f32 %v320, %v1339
  %v1348 = vsel %vm1190, %v1344, 0.0
  %v1349 = vsel %vm1190, %v1345, 0.0
  %v1350 = vadd.f32 %v1348, %v1349
  %v1351 = vsel %vm1190, %v1346, 0.0
  %v1352 = vadd.f32 %v1350, %v1351
  %v1353 = vsel %vm1190, %v1347, 0.0
  %v1354 = vadd.f32 %v1352, %v1353
  %v1355 = vrot.slane %v1354, 4
  %v1356 = vadd.f32 %v1354, %v1355
  %v1357 = vrot.slane %v1356, 2
  %v1358 = vadd.f32 %v1356, %v1357
  %v1359 = vrot.slane %v1358, 1
  %v1360 = vadd.f32 %v1358, %v1359
  %vm1361 = vcmask 254080
  %v1362 = vsel %vm1361, %v1203, -inf
  %v1363 = vsel %vm1361, %v1360, -inf
  %v1364 = vmax.f32 %v1362, %v1363
  %v1365 = vsub.f32 %v1203, %v1364
  %v1366 = vsub.f32 %v1360, %v1364
  %v1367 = vmul.f32 %v1365, 1.442695
  %v1368 = vpow.pop %v1367
  %v1369 = vmul.f32 %v1366, 1.442695
  %v1370 = vpow.pop %v1369
  %v1371 = vsel %vm1361, %v1368, 0.0
  %v1372 = vsel %vm1361, %v1370, 0.0
  %v1373 = vadd.f32 %v1371, %v1372
  %v1374 = vrcp.pop %v1373
  %v1375 = vmul.f32 %v1373, %v1374
  %v1376 = vsub.f32 1.0, %v1375
  %v1377 = vmul.f32 %v1374, %v1376
  %v1378 = vadd.f32 %v1374, %v1377
  %vm1379 = vweird.f32 %v1373
  %vm1380 = vweird.f32 %v1374
  %vm1381 = vmor %vm1379, %vm1380
  %v1382 = vsel %vm1381, %v1374, %v1378
  %v1383 = vand.u32 2147483647, %v1373
  %vm1384 = vcmp.eq.f32.partialorder %v1383, 8.507059e+37
  %v1385 = vand.u32 %v1373, 2147483648
  %v1386 = vor.u32 1.1754944e-38, %v1385
  %v1387 = vsel %vm1384, %v1386, %v1382
  %v1388 = vmul.f32 %v1368, %v1387
  %v1389 = vmul.f32 %v1370, %v1387
  %1390 = vrot.lane.b32.xlu0 %v421, 112
  %v1391 = vpop.permute.xlu0 %1390
  %1392 = vrot.lane.b32.xlu0 %v422, 112
  %v1393 = vpop.permute.xlu0 %1392
  %1394 = vrot.lane.b32.xlu0 %v423, 112
  %v1395 = vpop.permute.xlu0 %1394
  %1396 = vrot.lane.b32.xlu0 %v424, 112
  %v1397 = vpop.permute.xlu0 %1396
  %1402 = vrot.lane.b32.xlu0 %v421, 114
  %v1403 = vpop.permute.xlu0 %1402
  %1404 = vrot.lane.b32.xlu0 %v422, 114
  %v1405 = vpop.permute.xlu0 %1404
  %1406 = vrot.lane.b32.xlu0 %v423, 114
  %v1407 = vpop.permute.xlu0 %1406
  %1408 = vrot.lane.b32.xlu0 %v424, 114
  %v1409 = vpop.permute.xlu0 %1408
  %1414 = vrot.lane.b32.xlu0 %v421, 116
  %v1415 = vpop.permute.xlu0 %1414
  %1416 = vrot.lane.b32.xlu0 %v422, 116
  %v1417 = vpop.permute.xlu0 %1416
  %1418 = vrot.lane.b32.xlu0 %v423, 116
  %v1419 = vpop.permute.xlu0 %1418
  %1420 = vrot.lane.b32.xlu0 %v424, 116
  %v1421 = vpop.permute.xlu0 %1420
  %1426 = vrot.lane.b32.xlu0 %v421, 118
  %v1427 = vpop.permute.xlu0 %1426
  %1428 = vrot.lane.b32.xlu0 %v422, 118
  %v1429 = vpop.permute.xlu0 %1428
  %1430 = vrot.lane.b32.xlu0 %v423, 118
  %v1431 = vpop.permute.xlu0 %1430
  %1432 = vrot.lane.b32.xlu0 %v424, 118
  %v1433 = vpop.permute.xlu0 %1432
  %1438 = vrot.lane.b32.xlu0 %v421, 120
  %v1439 = vpop.permute.xlu0 %1438
  %1440 = vrot.lane.b32.xlu0 %v422, 120
  %v1441 = vpop.permute.xlu0 %1440
  %1442 = vrot.lane.b32.xlu0 %v423, 120
  %v1443 = vpop.permute.xlu0 %1442
  %1444 = vrot.lane.b32.xlu0 %v424, 120
  %v1445 = vpop.permute.xlu0 %1444
  %1450 = vrot.lane.b32.xlu0 %v421, 122
  %v1451 = vpop.permute.xlu0 %1450
  %1452 = vrot.lane.b32.xlu0 %v422, 122
  %v1453 = vpop.permute.xlu0 %1452
  %1454 = vrot.lane.b32.xlu0 %v423, 122
  %v1455 = vpop.permute.xlu0 %1454
  %1456 = vrot.lane.b32.xlu0 %v424, 122
  %v1457 = vpop.permute.xlu0 %1456
  %1462 = vrot.lane.b32.xlu0 %v421, 124
  %v1463 = vpop.permute.xlu0 %1462
  %1464 = vrot.lane.b32.xlu0 %v422, 124
  %v1465 = vpop.permute.xlu0 %1464
  %1466 = vrot.lane.b32.xlu0 %v423, 124
  %v1467 = vpop.permute.xlu0 %1466
  %1468 = vrot.lane.b32.xlu0 %v424, 124
  %v1469 = vpop.permute.xlu0 %1468
  %1474 = vrot.lane.b32.xlu0 %v421, 126
  %v1475 = vpop.permute.xlu0 %1474
  %1476 = vrot.lane.b32.xlu0 %v422, 126
  %v1477 = vpop.permute.xlu0 %1476
  %1478 = vrot.lane.b32.xlu0 %v423, 126
  %v1479 = vpop.permute.xlu0 %1478
  %1480 = vrot.lane.b32.xlu0 %v424, 126
  %v1481 = vpop.permute.xlu0 %1480
  %v1486 = vsel %vm513, %v1391, %v1403
  %v1487 = vsel %vm513, %v1393, %v1405
  %v1488 = vsel %vm513, %v1395, %v1407
  %v1489 = vsel %vm513, %v1397, %v1409
  %v1490 = vsel %vm518, %v1486, %v1415
  %v1491 = vsel %vm518, %v1487, %v1417
  %v1492 = vsel %vm518, %v1488, %v1419
  %v1493 = vsel %vm518, %v1489, %v1421
  %v1494 = vsel %vm523, %v1490, %v1427
  %v1495 = vsel %vm523, %v1491, %v1429
  %v1496 = vsel %vm523, %v1492, %v1431
  %v1497 = vsel %vm523, %v1493, %v1433
  %v1498 = vsel %vm528, %v1494, %v1439
  %v1499 = vsel %vm528, %v1495, %v1441
  %v1500 = vsel %vm528, %v1496, %v1443
  %v1501 = vsel %vm528, %v1497, %v1445
  %v1502 = vsel %vm533, %v1498, %v1451
  %v1503 = vsel %vm533, %v1499, %v1453
  %v1504 = vsel %vm533, %v1500, %v1455
  %v1505 = vsel %vm533, %v1501, %v1457
  %v1506 = vsel %vm538, %v1502, %v1463
  %v1507 = vsel %vm538, %v1503, %v1465
  %v1508 = vsel %vm538, %v1504, %v1467
  %v1509 = vsel %vm538, %v1505, %v1469
  %v1510 = vsel %vm543, %v1506, %v1475
  %v1511 = vsel %vm543, %v1507, %v1477
  %v1512 = vsel %vm543, %v1508, %v1479
  %v1513 = vsel %vm543, %v1509, %v1481
  %v1514 = vperm.slane %v1388, 0
  %1519 = vrot.lane.b32.xlu0 %v1510, 16
  %v1520 = vpop.permute.xlu0 %1519
  %1521 = vrot.lane.b32.xlu0 %v1511, 16
  %v1522 = vpop.permute.xlu0 %1521
  %1523 = vrot.lane.b32.xlu0 %v1512, 16
  %v1524 = vpop.permute.xlu0 %1523
  %1525 = vrot.lane.b32.xlu0 %v1513, 16
  %v1526 = vpop.permute.xlu0 %1525
  %v1531 = vmul.f32 %v1514, %v1520
  %v1532 = vmul.f32 %v1514, %v1522
  %v1533 = vmul.f32 %v1514, %v1524
  %v1534 = vmul.f32 %v1514, %v1526
  %1535 = vrot.lane.b32.xlu0 %v634, 106
  %v1536 = vpop.permute.xlu0 %1535
  %1537 = vrot.lane.b32.xlu0 %v635, 106
  %v1538 = vpop.permute.xlu0 %1537
  %1539 = vrot.lane.b32.xlu0 %v636, 106
  %v1540 = vpop.permute.xlu0 %1539
  %1541 = vrot.lane.b32.xlu0 %v637, 106
  %v1542 = vpop.permute.xlu0 %1541
  %1547 = vrot.lane.b32.xlu0 %v634, 108
  %v1548 = vpop.permute.xlu0 %1547
  %1549 = vrot.lane.b32.xlu0 %v635, 108
  %v1550 = vpop.permute.xlu0 %1549
  %1551 = vrot.lane.b32.xlu0 %v636, 108
  %v1552 = vpop.permute.xlu0 %1551
  %1553 = vrot.lane.b32.xlu0 %v637, 108
  %v1554 = vpop.permute.xlu0 %1553
  %1559 = vrot.lane.b32.xlu0 %v634, 110
  %v1560 = vpop.permute.xlu0 %1559
  %1561 = vrot.lane.b32.xlu0 %v635, 110
  %v1562 = vpop.permute.xlu0 %1561
  %1563 = vrot.lane.b32.xlu0 %v636, 110
  %v1564 = vpop.permute.xlu0 %1563
  %1565 = vrot.lane.b32.xlu0 %v637, 110
  %v1566 = vpop.permute.xlu0 %1565
  %1571 = vrot.lane.b32.xlu0 %v634, 112
  %v1572 = vpop.permute.xlu0 %1571
  %1573 = vrot.lane.b32.xlu0 %v635, 112
  %v1574 = vpop.permute.xlu0 %1573
  %1575 = vrot.lane.b32.xlu0 %v636, 112
  %v1576 = vpop.permute.xlu0 %1575
  %1577 = vrot.lane.b32.xlu0 %v637, 112
  %v1578 = vpop.permute.xlu0 %1577
  %1583 = vrot.lane.b32.xlu0 %v634, 114
  %v1584 = vpop.permute.xlu0 %1583
  %1585 = vrot.lane.b32.xlu0 %v635, 114
  %v1586 = vpop.permute.xlu0 %1585
  %1587 = vrot.lane.b32.xlu0 %v636, 114
  %v1588 = vpop.permute.xlu0 %1587
  %1589 = vrot.lane.b32.xlu0 %v637, 114
  %v1590 = vpop.permute.xlu0 %1589
  %1595 = vrot.lane.b32.xlu0 %v634, 116
  %v1596 = vpop.permute.xlu0 %1595
  %1597 = vrot.lane.b32.xlu0 %v635, 116
  %v1598 = vpop.permute.xlu0 %1597
  %1599 = vrot.lane.b32.xlu0 %v636, 116
  %v1600 = vpop.permute.xlu0 %1599
  %1601 = vrot.lane.b32.xlu0 %v637, 116
  %v1602 = vpop.permute.xlu0 %1601
  %1607 = vrot.lane.b32.xlu0 %v634, 118
  %v1608 = vpop.permute.xlu0 %1607
  %1609 = vrot.lane.b32.xlu0 %v635, 118
  %v1610 = vpop.permute.xlu0 %1609
  %1611 = vrot.lane.b32.xlu0 %v636, 118
  %v1612 = vpop.permute.xlu0 %1611
  %1613 = vrot.lane.b32.xlu0 %v637, 118
  %v1614 = vpop.permute.xlu0 %1613
  %1619 = vrot.lane.b32.xlu0 %v634, 120
  %v1620 = vpop.permute.xlu0 %1619
  %1621 = vrot.lane.b32.xlu0 %v635, 120
  %v1622 = vpop.permute.xlu0 %1621
  %1623 = vrot.lane.b32.xlu0 %v636, 120
  %v1624 = vpop.permute.xlu0 %1623
  %1625 = vrot.lane.b32.xlu0 %v637, 120
  %v1626 = vpop.permute.xlu0 %1625
  %v1631 = vsel %vm513, %v1536, %v1548
  %v1632 = vsel %vm513, %v1538, %v1550
  %v1633 = vsel %vm513, %v1540, %v1552
  %v1634 = vsel %vm513, %v1542, %v1554
  %v1635 = vsel %vm518, %v1631, %v1560
  %v1636 = vsel %vm518, %v1632, %v1562
  %v1637 = vsel %vm518, %v1633, %v1564
  %v1638 = vsel %vm518, %v1634, %v1566
  %v1639 = vsel %vm523, %v1635, %v1572
  %v1640 = vsel %vm523, %v1636, %v1574
  %v1641 = vsel %vm523, %v1637, %v1576
  %v1642 = vsel %vm523, %v1638, %v1578
  %v1643 = vsel %vm528, %v1639, %v1584
  %v1644 = vsel %vm528, %v1640, %v1586
  %v1645 = vsel %vm528, %v1641, %v1588
  %v1646 = vsel %vm528, %v1642, %v1590
  %v1647 = vsel %vm533, %v1643, %v1596
  %v1648 = vsel %vm533, %v1644, %v1598
  %v1649 = vsel %vm533, %v1645, %v1600
  %v1650 = vsel %vm533, %v1646, %v1602
  %v1651 = vsel %vm538, %v1647, %v1608
  %v1652 = vsel %vm538, %v1648, %v1610
  %v1653 = vsel %vm538, %v1649, %v1612
  %v1654 = vsel %vm538, %v1650, %v1614
  %v1655 = vsel %vm543, %v1651, %v1620
  %v1656 = vsel %vm543, %v1652, %v1622
  %v1657 = vsel %vm543, %v1653, %v1624
  %v1658 = vsel %vm543, %v1654, %v1626
  %v1659 = vperm.slane %v1389, 0
  %1664 = vrot.lane.b32.xlu0 %v1655, 16
  %v1665 = vpop.permute.xlu0 %1664
  %1666 = vrot.lane.b32.xlu0 %v1656, 16
  %v1667 = vpop.permute.xlu0 %1666
  %1668 = vrot.lane.b32.xlu0 %v1657, 16
  %v1669 = vpop.permute.xlu0 %1668
  %1670 = vrot.lane.b32.xlu0 %v1658, 16
  %v1671 = vpop.permute.xlu0 %1670
  %v1676 = vmul.f32 %v1659, %v1665
  %v1677 = vmul.f32 %v1659, %v1667
  %v1678 = vmul.f32 %v1659, %v1669
  %v1679 = vmul.f32 %v1659, %v1671
  %v1680 = vadd.f32 %v1531, %v1676
  %v1681 = vadd.f32 %v1532, %v1677
  %v1682 = vadd.f32 %v1533, %v1678
  %v1683 = vadd.f32 %v1534, %v1679
  %vm1684 = vcmask 128000
  %1685 = vst.msk [vmem:[#allocation2] sm:$0x3f] %vm1684, 0.0
  %1686 = vst.msk [vmem:[#allocation2 + $0x8] sm:$0x3f] %vm1684, 0.0
  %1687 = vst.msk [vmem:[#allocation2 + $0x10] sm:$0x3f] %vm1684, 0.0
  %1688 = vst.msk [vmem:[#allocation2 + $0x18] sm:$0x3f] %vm1684, 0.0
  %1689 = vst.msk [vmem:[#allocation2 + $0x20] sm:$0x3f] %vm1684, 0.0
  %1690 = vst.msk [vmem:[#allocation2 + $0x28] sm:$0x3f] %vm1684, 0.0
  %1691 = vst.msk [vmem:[#allocation2 + $0x30] sm:$0x3f] %vm1684, 0.0
  %1692 = vst.msk [vmem:[#allocation2 + $0x38] sm:$0x3f] %vm1684, 0.0
  %1693 = vst.msk [vmem:[#allocation2 + $0x40] sm:$0x3f] %vm1684, 0.0
  %1694 = vst.msk [vmem:[#allocation2 + $0x48] sm:$0x3f] %vm1684, 0.0
  %1695 = vst.msk [vmem:[#allocation2 + $0x50] sm:$0x3f] %vm1684, 0.0
  %1696 = vst.msk [vmem:[#allocation2 + $0x58] sm:$0x3f] %vm1684, 0.0
  %s1697 = scalar_lea.vmem [#allocation2], 8
  %1698 = vst.msk [vmem:[%s1697 + $0x1] sm:$0xf] %vm552, %v1042
  %1699 = vst.msk [vmem:[%s1697 + $0x9] sm:$0xf] %vm552, %v1043
  %1700 = vst.msk [vmem:[%s1697 + $0x11] sm:$0xf] %vm552, %v1044
  %1701 = vst.msk [vmem:[%s1697 + $0x19] sm:$0xf] %vm552, %v1045
  %1706 = vrot.lane.b32.xlu0 %v1680, 112
  %v1707 = vpop.permute.xlu0 %1706
  %1708 = vrot.lane.b32.xlu0 %v1681, 112
  %v1709 = vpop.permute.xlu0 %1708
  %1710 = vrot.lane.b32.xlu0 %v1682, 112
  %v1711 = vpop.permute.xlu0 %1710
  %1712 = vrot.lane.b32.xlu0 %v1683, 112
  %v1713 = vpop.permute.xlu0 %1712
  %s1718 = scalar_lea.vmem [#allocation2], 56
  %1719 = vst.msk [vmem:[%s1718 + $0x1] sm:$0xf] %vm552, %v1707
  %1720 = vst.msk [vmem:[%s1718 + $0x9] sm:$0xf] %vm552, %v1709
  %1721 = vst.msk [vmem:[%s1718 + $0x11] sm:$0xf] %vm552, %v1711
  %1722 = vst.msk [vmem:[%s1718 + $0x19] sm:$0xf] %vm552, %v1713
  %v1723 = vld [vmem:[#allocation2] sm:$0x3f]
  %v1724 = vld [vmem:[#allocation2 + $0x8] sm:$0x3f]
  %v1725 = vld [vmem:[#allocation2 + $0x10] sm:$0x3f]
  %v1726 = vld [vmem:[#allocation2 + $0x18] sm:$0x3f]
  %v1727 = vld [vmem:[#allocation2 + $0x20] sm:$0x3f]
  %v1728 = vld [vmem:[#allocation2 + $0x28] sm:$0x3f]
  %s1729 = scalar_lea.vmem [#allocation2], 48
  %v1730 = vld [vmem:[%s1729] sm:$0x3f]
  %v1731 = vld [vmem:[%s1729 + $0x8] sm:$0x3f]
  %v1732 = vld [vmem:[%s1729 + $0x10] sm:$0x3f]
  %v1733 = vld [vmem:[%s1729 + $0x18] sm:$0x3f]
  %v1734 = vld [vmem:[%s1729 + $0x20] sm:$0x3f]
  %v1735 = vld [vmem:[%s1729 + $0x28] sm:$0x3f]
  %1742 = vrot.lane.b32.xlu0 %v1730, 16
  %v1743 = vpop.permute.xlu0 %1742
  %1744 = vrot.lane.b32.xlu0 %v1731, 16
  %v1745 = vpop.permute.xlu0 %1744
  %1746 = vrot.lane.b32.xlu0 %v1732, 16
  %v1747 = vpop.permute.xlu0 %1746
  %1748 = vrot.lane.b32.xlu0 %v1733, 16
  %v1749 = vpop.permute.xlu0 %1748
  %1750 = vrot.lane.b32.xlu0 %v1734, 16
  %v1751 = vpop.permute.xlu0 %1750
  %1752 = vrot.lane.b32.xlu0 %v1735, 16
  %v1753 = vpop.permute.xlu0 %1752
  %v1760 = vsel %vm128, %v1723, %v1743
  %v1761 = vsel %vm128, %v1724, %v1745
  %v1762 = vsel %vm128, %v1725, %v1747
  %v1763 = vsel %vm128, %v1726, %v1749
  %v1764 = vsel %vm128, %v1727, %v1751
  %v1765 = vsel %vm128, %v1728, %v1753
  %v1766 = vld [vmem:[%s4] sm:$0x1]
  %v1767 = vperm.slane %v1766, 0
  %v1768 = vmul.f32 %v1767, %v1760
  %v1769 = vmul.f32 %v1767, %v1761
  %v1770 = vmul.f32 %v1767, %v1762
  %v1771 = vmul.f32 %v1767, %v1763
  %v1772 = vld [vmem:[%s4 + $0x1] sm:$0x1]
  %v1773 = vperm.slane %v1772, 0
  %v1774 = vmul.f32 %v1773, %v1760
  %v1775 = vmul.f32 %v1773, %v1761
  %v1776 = vmul.f32 %v1773, %v1762
  %v1777 = vmul.f32 %v1773, %v1763
  %v1782 = vrot.slane %v1774, 1
  %v1783 = vrot.slane %v1775, 1
  %v1784 = vrot.slane %v1776, 1
  %v1785 = vrot.slane %v1777, 1
  %v1790 = vadd.f32 %v1768, %v1782
  %v1791 = vadd.f32 %v1769, %v1783
  %v1792 = vadd.f32 %v1770, %v1784
  %v1793 = vadd.f32 %v1771, %v1785
  %v1794 = vld [vmem:[%s4 + $0x2] sm:$0x1]
  %v1795 = vperm.slane %v1794, 0
  %v1796 = vmul.f32 %v1795, %v1760
  %v1797 = vmul.f32 %v1795, %v1761
  %v1798 = vmul.f32 %v1795, %v1762
  %v1799 = vmul.f32 %v1795, %v1763
  %v1804 = vrot.slane %v1796, 2
  %v1805 = vrot.slane %v1797, 2
  %v1806 = vrot.slane %v1798, 2
  %v1807 = vrot.slane %v1799, 2
  %v1812 = vadd.f32 %v1790, %v1804
  %v1813 = vadd.f32 %v1791, %v1805
  %v1814 = vadd.f32 %v1792, %v1806
  %v1815 = vadd.f32 %v1793, %v1807
  %v1816 = vld [vmem:[%s4 + $0x3] sm:$0x1]
  %v1817 = vperm.slane %v1816, 0
  %v1818 = vmul.f32 %v1817, %v1761
  %v1819 = vmul.f32 %v1817, %v1762
  %v1820 = vmul.f32 %v1817, %v1763
  %v1821 = vmul.f32 %v1817, %v1764
  %v1822 = vadd.f32 %v1812, %v1818
  %v1823 = vadd.f32 %v1813, %v1819
  %v1824 = vadd.f32 %v1814, %v1820
  %v1825 = vadd.f32 %v1815, %v1821
  %v1826 = vld [vmem:[%s4 + $0x4] sm:$0x1]
  %v1827 = vperm.slane %v1826, 0
  %v1828 = vmul.f32 %v1827, %v1761
  %v1829 = vmul.f32 %v1827, %v1762
  %v1830 = vmul.f32 %v1827, %v1763
  %v1831 = vmul.f32 %v1827, %v1764
  %v1836 = vrot.slane %v1828, 1
  %v1837 = vrot.slane %v1829, 1
  %v1838 = vrot.slane %v1830, 1
  %v1839 = vrot.slane %v1831, 1
  %v1844 = vadd.f32 %v1822, %v1836
  %v1845 = vadd.f32 %v1823, %v1837
  %v1846 = vadd.f32 %v1824, %v1838
  %v1847 = vadd.f32 %v1825, %v1839
  %v1848 = vld [vmem:[%s4 + $0x5] sm:$0x1]
  %v1849 = vperm.slane %v1848, 0
  %v1850 = vmul.f32 %v1849, %v1761
  %v1851 = vmul.f32 %v1849, %v1762
  %v1852 = vmul.f32 %v1849, %v1763
  %v1853 = vmul.f32 %v1849, %v1764
  %v1858 = vrot.slane %v1850, 2
  %v1859 = vrot.slane %v1851, 2
  %v1860 = vrot.slane %v1852, 2
  %v1861 = vrot.slane %v1853, 2
  %v1866 = vadd.f32 %v1844, %v1858
  %v1867 = vadd.f32 %v1845, %v1859
  %v1868 = vadd.f32 %v1846, %v1860
  %v1869 = vadd.f32 %v1847, %v1861
  %v1870 = vld [vmem:[%s4 + $0x6] sm:$0x1]
  %v1871 = vperm.slane %v1870, 0
  %v1872 = vmul.f32 %v1871, %v1762
  %v1873 = vmul.f32 %v1871, %v1763
  %v1874 = vmul.f32 %v1871, %v1764
  %v1875 = vmul.f32 %v1871, %v1765
  %v1876 = vadd.f32 %v1866, %v1872
  %v1877 = vadd.f32 %v1867, %v1873
  %v1878 = vadd.f32 %v1868, %v1874
  %v1879 = vadd.f32 %v1869, %v1875
  %v1880 = vld [vmem:[%s4 + $0x7] sm:$0x1]
  %v1881 = vperm.slane %v1880, 0
  %v1882 = vmul.f32 %v1881, %v1762
  %v1883 = vmul.f32 %v1881, %v1763
  %v1884 = vmul.f32 %v1881, %v1764
  %v1885 = vmul.f32 %v1881, %v1765
  %v1890 = vrot.slane %v1882, 1
  %v1891 = vrot.slane %v1883, 1
  %v1892 = vrot.slane %v1884, 1
  %v1893 = vrot.slane %v1885, 1
  %v1898 = vadd.f32 %v1876, %v1890
  %v1899 = vadd.f32 %v1877, %v1891
  %v1900 = vadd.f32 %v1878, %v1892
  %v1901 = vadd.f32 %v1879, %v1893
  %v1902 = vld [vmem:[%s4 + $0x8] sm:$0x1]
  %v1903 = vperm.slane %v1902, 0
  %v1904 = vmul.f32 %v1903, %v1762
  %v1905 = vmul.f32 %v1903, %v1763
  %v1906 = vmul.f32 %v1903, %v1764
  %v1907 = vmul.f32 %v1903, %v1765
  %v1912 = vrot.slane %v1904, 2
  %v1913 = vrot.slane %v1905, 2
  %v1914 = vrot.slane %v1906, 2
  %v1915 = vrot.slane %v1907, 2
  %v1920 = vadd.f32 %v1898, %v1912
  %v1921 = vadd.f32 %v1899, %v1913
  %v1922 = vadd.f32 %v1900, %v1914
  %v1923 = vadd.f32 %v1901, %v1915
  %1928 = vrot.lane.b32.xlu0 %v1920, 112
  %v1929 = vpop.permute.xlu0 %1928
  %1930 = vrot.lane.b32.xlu0 %v1921, 112
  %v1931 = vpop.permute.xlu0 %1930
  %1932 = vrot.lane.b32.xlu0 %v1922, 112
  %v1933 = vpop.permute.xlu0 %1932
  %1934 = vrot.lane.b32.xlu0 %v1923, 112
  %v1935 = vpop.permute.xlu0 %1934
  %v1940 = vadd.f32 %v1920, %v1929
  %v1941 = vadd.f32 %v1921, %v1931
  %v1942 = vadd.f32 %v1922, %v1933
  %v1943 = vadd.f32 %v1923, %v1935
  %v1944 = vsel %vm552, %v1940, 0.0
  %v1945 = vsel %vm552, %v1941, 0.0
  %v1946 = vadd.f32 %v1944, %v1945
  %v1947 = vsel %vm552, %v1942, 0.0
  %v1948 = vadd.f32 %v1946, %v1947
  %v1949 = vsel %vm552, %v1943, 0.0
  %v1950 = vadd.f32 %v1948, %v1949
  %v1951 = vrot.slane %v1950, 4
  %v1952 = vadd.f32 %v1950, %v1951
  %v1953 = vrot.slane %v1952, 2
  %v1954 = vadd.f32 %v1952, %v1953
  %v1955 = vrot.slane %v1954, 1
  %v1956 = vadd.f32 %v1954, %v1955
  %v1957 = vrcp.pop 16.0
  %v1958 = vmul.f32 16.0, %v1957
  %v1959 = vsub.f32 1.0, %v1958
  %v1960 = vmul.f32 %v1957, %v1959
  %v1961 = vadd.f32 %v1957, %v1960
  %vm1962 = vweird.f32 %v1957
  %v1963 = vsel %vm1962, %v1957, %v1961
  %v1964 = vmul.f32 %v1956, %v1963
  %v1965 = vsub.f32 %v1940, %v1964
  %v1966 = vsub.f32 %v1941, %v1964
  %v1967 = vsub.f32 %v1942, %v1964
  %v1968 = vsub.f32 %v1943, %v1964
  %v1969 = vmul.f32 %v1965, %v1965
  %v1970 = vmul.f32 %v1966, %v1966
  %v1971 = vmul.f32 %v1967, %v1967
  %v1972 = vmul.f32 %v1968, %v1968
  %v1973 = vsel %vm552, %v1969, 0.0
  %v1974 = vsel %vm552, %v1970, 0.0
  %v1975 = vadd.f32 %v1973, %v1974
  %v1976 = vsel %vm552, %v1971, 0.0
  %v1977 = vadd.f32 %v1975, %v1976
  %v1978 = vsel %vm552, %v1972, 0.0
  %v1979 = vadd.f32 %v1977, %v1978
  %v1980 = vrot.slane %v1979, 4
  %v1981 = vadd.f32 %v1979, %v1980
  %v1982 = vrot.slane %v1981, 2
  %v1983 = vadd.f32 %v1981, %v1982
  %v1984 = vrot.slane %v1983, 1
  %v1985 = vadd.f32 %v1983, %v1984
  %v1986 = vmul.f32 %v1985, %v1963
  %v1987 = vadd.f32 %v1986, 1e-05
  %v1988 = vrsqrt.pop %v1987
  %v1989 = vmul.f32 %v1988, %v1987
  %v1990 = vmul.f32 %v1989, %v1988
  %v1991 = vmul.f32 0.5, %v1990
  %v1992 = vsub.f32 1.5, %v1991
  %v1993 = vmul.f32 %v1988, %v1992
  %v1994 = vmul.f32 %v1987, %v1993
  %vm1995 = vcmp.eq.f32.partialorder %v1987, inf
  %v1996 = vsel %vm1995, %v1987, %v1994
  %vm1997 = vcmp.eq.f32.partialorder %v1987, 0.0
  %v1998 = vand.u32 %v1987, 2147483648
  %v1999 = vsel %vm1997, %v1998, %v1996
  %v2000 = vrcp.pop %v1999
  %v2001 = vmul.f32 %v1999, %v2000
  %v2002 = vsub.f32 1.0, %v2001
  %v2003 = vmul.f32 %v2000, %v2002
  %v2004 = vadd.f32 %v2000, %v2003
  %vm2005 = vweird.f32 %v1999
  %vm2006 = vweird.f32 %v2000
  %vm2007 = vmor %vm2005, %vm2006
  %v2008 = vsel %vm2007, %v2000, %v2004
  %v2009 = vand.u32 2147483647, %v1999
  %vm2010 = vcmp.eq.f32.partialorder %v2009, 8.507059e+37
  %v2011 = vand.u32 %v1999, 2147483648
  %v2012 = vor.u32 1.1754944e-38, %v2011
  %v2013 = vsel %vm2010, %v2012, %v2008
  %v2014 = vmul.f32 %v1965, %v2013
  %v2015 = vmul.f32 %v1966, %v2013
  %v2016 = vmul.f32 %v1967, %v2013
  %v2017 = vmul.f32 %v1968, %v2013
  %v2018 = vld [vmem:[%s5] sm:$0xf]
  %v2019 = vld [vmem:[%s5 + $0x4] sm:$0xf]
  %v2020 = vld [vmem:[%s5 + $0x8] sm:$0xf]
  %v2021 = vld [vmem:[%s5 + $0xc] sm:$0xf]
  %v2022 = vmul.f32 %v2014, %v2018
  %v2023 = vmul.f32 %v2015, %v2019
  %v2024 = vmul.f32 %v2016, %v2020
  %v2025 = vmul.f32 %v2017, %v2021
  %v2026 = vld [vmem:[%s6] sm:$0xf]
  %v2027 = vld [vmem:[%s6 + $0x4] sm:$0xf]
  %v2028 = vld [vmem:[%s6 + $0x8] sm:$0xf]
  %v2029 = vld [vmem:[%s6 + $0xc] sm:$0xf]
  %v2030 = vadd.f32 %v2022, %v2026
  %v2031 = vadd.f32 %v2023, %v2027
  %v2032 = vadd.f32 %v2024, %v2028
  %v2033 = vadd.f32 %v2025, %v2029
  %2034 = vst.msk [vmem:[%s7] sm:$0xf] %vm552, %v2030
  %2035 = vst.msk [vmem:[%s7 + $0x4] sm:$0xf] %vm552, %v2031
  %2036 = vst.msk [vmem:[%s7 + $0x8] sm:$0xf] %vm552, %v2032
  %2037 = vst.msk [vmem:[%s7 + $0xc] sm:$0xf] %vm552, %v2033
  // Predicated region
  $region30: #{attention_forward.1} parent=0 // pred_check
    _
  $region31: #{attention_forward.1} parent=0 // pred_check_branch
    %2039 = sbr.rel (0) target = $region33
  $region32: #{attention_forward.1} parent=0 // pred_region
    _
  $region33: #{attention_forward.1} parent=0 // pred_fallthru
    _
  // Predicated region
  $region34: #{attention_forward.1} parent=0 // pred_check
    _
  $region35: #{attention_forward.1} parent=0 // pred_check_branch
    %2041 = sbr.rel (0) target = $region37
  $region36: #{attention_forward.1} parent=0 // pred_region
    _
  $region37: #{attention_forward.1} parent=0 // pred_fallthru
    _

</llo_original>
